<compile_context>
chip_gen: v6e
topology: v6e:2x2x1
jax: 0.10.0
libtpu: 0.0.40
codegen_flags: <defaults>
</compile_context>

<pallas_src>
import jax
import jax.numpy as jnp
import numpy as np
from jax.experimental import pallas as pl
from jax.experimental.pallas import tpu as pltpu


# ------------------- kernel 1: per-point conv MLP + max-pool ----------------
def conv_maxpool_kernel(
    x_ref,                        # (1, TN, C)  f32   point tile of one batch
    w1_ref, s1_ref, t1_ref,       # (C, 64) f32, (1, 64) f32, (1, 64) f32
    w2_ref, s2_ref, t2_ref,       # (64, 128) bf16, (1, 128) f32 x2
    w3_ref, s3_ref, t3_ref,       # (128, 1024) bf16, (1, 1024) f32 x2
    pooled_ref,                   # (1, 1, 1024) f32  resident across the N axis
):
    n = pl.program_id(1)
    x = x_ref[0]                                        # (TN, C) f32
    cin = x.shape[1]

    # conv1: K = C (=3) is far too small for the MXU -> VPU broadcast-MACs.
    h = x[:, 0:1] * w1_ref[0:1, :]                      # (TN, 64)
    for c in range(1, cin):                             # static unroll, C tiny
        h = h + x[:, c:c + 1] * w1_ref[c:c + 1, :]
    h = jnp.maximum(h * s1_ref[...] + t1_ref[...], 0.0)

    def mlp(a, w_ref, s_ref, t_ref):
        # bf16 MXU matmul, f32 accumulate, f32 BN/ReLU epilogue on the VPU.
        y = jnp.dot(a.astype(jnp.bfloat16), w_ref[...],
                    preferred_element_type=jnp.float32)
        return jnp.maximum(y * s_ref[...] + t_ref[...], 0.0)

    h = mlp(h, w2_ref, s2_ref, t2_ref)                  # (TN, 128)
    h = mlp(h, w3_ref, s3_ref, t3_ref)                  # (TN, 1024)

    tile_max = jnp.max(h, axis=0, keepdims=True)        # (1, 1024)

    @pl.when(n == 0)
    def _init():
        pooled_ref[0] = tile_max

    @pl.when(n > 0)
    def _acc():
        pooled_ref[0] = jnp.maximum(pooled_ref[0], tile_max)


# ----------------------- kernel 2: batched FC head ---------------------------
def fc_head_kernel(
    g_ref,                        # (B, 1024) f32   pooled features, all batches
    f1_ref, fs1_ref, ft1_ref,     # (1024, 512) bf16, (1, 512) f32 x2
    f2_ref, fs2_ref, ft2_ref,     # (512, 256) bf16, (1, 256) f32 x2
    f3_ref, fb3_ref,              # (256, 128) bf16 (zero padded), (1, 128) f32
    out_ref,                      # (B, 128) f32    lane-dense padded output
):
    def mlp(a, w_ref, s_ref, t_ref):
        y = jnp.dot(a.astype(jnp.bfloat16), w_ref[...],
                    preferred_element_type=jnp.float32)
        return jnp.maximum(y * s_ref[...] + t_ref[...], 0.0)

    f = mlp(g_ref[...], f1_ref, fs1_ref, ft1_ref)       # (B, 512)
    f = mlp(f, f2_ref, fs2_ref, ft2_ref)                # (B, 256)
    out_ref[...] = (
        jnp.dot(f.astype(jnp.bfloat16), f3_ref[...],
                preferred_element_type=jnp.float32) + fb3_ref[...])


# ------------------------------ wrapper --------------------------------------
def _round_up(x, m):
    return (x + m - 1) // m * m


def _const_spec(shape):
    return pl.BlockSpec(shape, lambda b, n: (0,) * len(shape))


def stn3d_forward(x_bnc, kp, *, max_tile_n=512):
    """x_bnc: (B, N, C) f32 point clouds.  kp: folded kernel params.  -> (B, 3, 3)."""
    B, N, C = x_bnc.shape

    # Tile the points axis so the (tile_N, 1024) f32 activation stays <= ~2 MiB
    # (safe under v7x's 64 MiB VMEM and the 32 MiB default scoped limit).
    tile_n = min(max_tile_n, _round_up(N, 8))
    n_pad = _round_up(N, tile_n)
    if n_pad != N:
        # Pad by replicating point 0 -- duplicates never change the max-pool.
        pad = jnp.broadcast_to(x_bnc[:, :1, :], (B, n_pad - N, C))
        x_bnc = jnp.concatenate([x_bnc, pad], axis=1)

    conv_w = (kp["w1"], kp["s1"], kp["t1"],
              kp["w2"], kp["s2"], kp["t2"],
              kp["w3"], kp["s3"], kp["t3"])

    conv_flops = 2 * B * n_pad * (C * 64 + 64 * 128 + 128 * 1024)
    conv_bytes = (int(x_bnc.size) * 4
                  + sum(int(a.size) * a.dtype.itemsize for a in conv_w)
                  + B * 1024 * 4)

    # NOTE: weight blocks use constant index maps (same block every grid step),
    # so they are DMA'd once; they total < 0.5 MiB in bf16.
    pooled = pl.pallas_call(
        conv_maxpool_kernel,
        out_shape=jax.ShapeDtypeStruct((B, 1, 1024), jnp.float32),
        grid_spec=pltpu.PrefetchScalarGridSpec(
            num_scalar_prefetch=0,
            grid=(B, n_pad // tile_n),
            in_specs=[pl.BlockSpec((1, tile_n, C), lambda b, n: (b, n, 0))]
                     + [_const_spec(a.shape) for a in conv_w],
            out_specs=pl.BlockSpec((1, 1, 1024), lambda b, n: (b, 0, 0)),
        ),
        compiler_params=pltpu.CompilerParams(
            dimension_semantics=("parallel", "arbitrary")),
        cost_estimate=pl.CostEstimate(
            flops=conv_flops, transcendentals=0, bytes_accessed=conv_bytes),
    )(x_bnc, *conv_w)

    g = pooled.reshape(B, 1024)                          # pooled features

    head_w = (kp["f1"], kp["fs1"], kp["ft1"],
              kp["f2"], kp["fs2"], kp["ft2"],
              kp["f3"], kp["fb3"])
    head_flops = 2 * B * (1024 * 512 + 512 * 256 + 256 * 128)
    head_bytes = (int(g.size) * 4
                  + sum(int(a.size) * a.dtype.itemsize for a in head_w)
                  + B * 128 * 4)

    out = pl.pallas_call(
        fc_head_kernel,
        out_shape=jax.ShapeDtypeStruct((B, 128), jnp.float32),
        cost_estimate=pl.CostEstimate(
            flops=head_flops, transcendentals=0, bytes_accessed=head_bytes),
    )(g, *head_w)

    return out[:, :9].reshape(B, 3, 3)


# ------------------------- parameter construction ---------------------------
def _uniform(key, shape, lo, hi):
    return jax.random.uniform(key, shape, jnp.float32, lo, hi)


def init_params(key, channel):
    """Deterministic synthetic params matching the torch module's shapes."""
    dims = [
        ("conv1", channel, 64), ("conv2", 64, 128), ("conv3", 128, 1024),
        ("fc1", 1024, 512), ("fc2", 512, 256), ("fc3", 256, 9),
    ]
    p = {}
    for name, cin, cout in dims:
        key, kw, kb = jax.random.split(key, 3)
        bound = 1.0 / np.sqrt(cin)
        p[name + "_w"] = _uniform(kw, (cout, cin), -bound, bound)   # torch (out, in)
        p[name + "_b"] = _uniform(kb, (cout,), -bound, bound)
    for name, c in [("bn1", 64), ("bn2", 128), ("bn3", 1024), ("bn4", 512), ("bn5", 256)]:
        key, k1, k2, k3, k4 = jax.random.split(key, 5)
        p[name + "_g"] = _uniform(k1, (c,), 0.8, 1.2)
        p[name + "_be"] = _uniform(k2, (c,), -0.1, 0.1)
        p[name + "_m"] = _uniform(k3, (c,), -0.1, 0.1)
        p[name + "_v"] = _uniform(k4, (c,), 0.9, 1.1)
    return p


def to_kernel_params(p, eps=1e-5):
    """Fold bias + eval-mode BN into per-channel (scale, shift); transpose MXU
    weights and cast them to bf16 (scale/shift/bias stay f32; conv1 stays f32
    since it runs on the VPU)."""
    def fold(lname, bname):
        s = p[bname + "_g"] / jnp.sqrt(p[bname + "_v"] + eps)
        t = (p[lname + "_b"] - p[bname + "_m"]) * s + p[bname + "_be"]
        return p[lname + "_w"].T, s[None, :], t[None, :]

    kp = {}
    kp["w1"], kp["s1"], kp["t1"] = fold("conv1", "bn1")             # f32 (VPU)
    for key, lname, bname in [("2", "conv2", "bn2"), ("3", "conv3", "bn3")]:
        w, s, t = fold(lname, bname)
        kp["w" + key], kp["s" + key], kp["t" + key] = w.astype(jnp.bfloat16), s, t
    for key, lname, bname in [("1", "fc1", "bn4"), ("2", "fc2", "bn5")]:
        w, s, t = fold(lname, bname)
        kp["f" + key], kp["fs" + key], kp["ft" + key] = w.astype(jnp.bfloat16), s, t

    iden = jnp.array([1, 0, 0, 0, 1, 0, 0, 0, 1], jnp.float32)
    w3 = p["fc3_w"].T                                               # (256, 9)
    kp["f3"] = jnp.pad(w3, ((0, 0), (0, 128 - 9))).astype(jnp.bfloat16)   # (256, 128)
    b3 = p["fc3_b"] + iden                                          # identity folded in
    kp["fb3"] = jnp.pad(b3, (0, 128 - 9))[None, :]                  # (1, 128) f32
    return kp


# ---------------------------- pure-JAX reference ----------------------------
def ref_stn3d(x_bcn, p, eps=1e-5):
    hp = jax.lax.Precision.HIGHEST

    def conv_bn_relu(x, lname, bname):
        y = jnp.einsum("oc,bcn->bon", p[lname + "_w"], x, precision=hp)
        y = y + p[lname + "_b"][None, :, None]
        y = (y - p[bname + "_m"][None, :, None]) / jnp.sqrt(p[bname + "_v"] + eps)[None, :, None]
        y = y * p[bname + "_g"][None, :, None] + p[bname + "_be"][None, :, None]
        return jnp.maximum(y, 0.0)

    def fc_bn_relu(x, lname, bname):
        y = x @ p[lname + "_w"].T + p[lname + "_b"]
        y = (y - p[bname + "_m"]) / jnp.sqrt(p[bname + "_v"] + eps)
        y = y * p[bname + "_g"] + p[bname + "_be"]
        return jnp.maximum(y, 0.0)

    h = conv_bn_relu(x_bcn, "conv1", "bn1")
    h = conv_bn_relu(h, "conv2", "bn2")
    h = conv_bn_relu(h, "conv3", "bn3")
    g = jnp.max(h, axis=2)                               # (B, 1024)
    f = fc_bn_relu(g, "fc1", "bn4")
    f = fc_bn_relu(f, "fc2", "bn5")
    o = f @ p["fc3_w"].T + p["fc3_b"]
    iden = jnp.array([1, 0, 0, 0, 1, 0, 0, 0, 1], jnp.float32)
    o = o + iden[None, :]
    return o.reshape(-1, 3, 3)


# ----------------------------------- main ------------------------------------
if __name__ == "__main__":
    B, C, N = 2, 3, 128                                  # small shapes (batch, xyz, points)
    key = jax.random.PRNGKey(0)
    kx, kparams = jax.random.split(key)

    x_bcn = jax.random.normal(kx, (B, C, N), jnp.float32)   # PyTorch NCW input
    params = init_params(kparams, channel=C)
    kp = to_kernel_params(params)

    x_bnc = jnp.transpose(x_bcn, (0, 2, 1))              # kernel layout (B, N, C)
    out = jax.block_until_ready(stn3d_forward(x_bnc, kp))

    ref = jax.block_until_ready(ref_stn3d(x_bcn, params))
    # Tolerance loosened slightly vs the pure-f32 version: MXU operands are bf16
    # (f32 accumulation + f32 epilogue).
    np.testing.assert_allclose(np.asarray(out), np.asarray(ref), rtol=2e-2, atol=2e-2)

    assert out.shape == (B, 3, 3) and out.dtype == jnp.float32
    print("KERNEL_OK")
</pallas_src>

<mosaic_0001>
module attributes {stable_mosaic.version = 11 : i64} {
  func.func @conv_maxpool_kernel(%arg0: i32, %arg1: i32, %arg2: memref<1x128x3xf32, #tpu.memory_space<vmem>>, %arg3: memref<3x64xf32, #tpu.memory_space<vmem>>, %arg4: memref<1x64xf32, #tpu.memory_space<vmem>>, %arg5: memref<1x64xf32, #tpu.memory_space<vmem>>, %arg6: memref<64x128xbf16, #tpu.memory_space<vmem>>, %arg7: memref<1x128xf32, #tpu.memory_space<vmem>>, %arg8: memref<1x128xf32, #tpu.memory_space<vmem>>, %arg9: memref<128x1024xbf16, #tpu.memory_space<vmem>>, %arg10: memref<1x1024xf32, #tpu.memory_space<vmem>>, %arg11: memref<1x1024xf32, #tpu.memory_space<vmem>>, %arg12: memref<1x1x1024xf32, #tpu.memory_space<vmem>>) attributes {dimension_semantics = [#tpu.dimension_semantics<parallel>, #tpu.dimension_semantics<arbitrary>], iteration_bounds = array<i64: 2, 1>, scalar_prefetch = 0 : i64, scratch_operands = 0 : i64, tpu.core_type = #tpu.core_type<tc>, window_params = [{transform_indices = @transform_0, window_bounds = array<i64: 1, 128, 3>}, {pipeline_mode = #tpu.pipeline_mode<synchronous>, transform_indices = @transform_1, window_bounds = array<i64: 3, 64>}, {pipeline_mode = #tpu.pipeline_mode<synchronous>, transform_indices = @transform_2, window_bounds = array<i64: 1, 64>}, {pipeline_mode = #tpu.pipeline_mode<synchronous>, transform_indices = @transform_3, window_bounds = array<i64: 1, 64>}, {pipeline_mode = #tpu.pipeline_mode<synchronous>, transform_indices = @transform_4, window_bounds = array<i64: 64, 128>}, {pipeline_mode = #tpu.pipeline_mode<synchronous>, transform_indices = @transform_5, window_bounds = array<i64: 1, 128>}, {pipeline_mode = #tpu.pipeline_mode<synchronous>, transform_indices = @transform_6, window_bounds = array<i64: 1, 128>}, {pipeline_mode = #tpu.pipeline_mode<synchronous>, transform_indices = @transform_7, window_bounds = array<i64: 128, 1024>}, {pipeline_mode = #tpu.pipeline_mode<synchronous>, transform_indices = @transform_8, window_bounds = array<i64: 1, 1024>}, {pipeline_mode = #tpu.pipeline_mode<synchronous>, transform_indices = @transform_9, window_bounds = array<i64: 1, 1024>}, {transform_indices = @transform_10, window_bounds = array<i64: 1, 1, 1024>}]} {
    %c0 = arith.constant 0 : index
    %c0_0 = arith.constant 0 : index
    %c0_1 = arith.constant 0 : index
    %0 = vector.load %arg2[%c0, %c0_0, %c0_1] : memref<1x128x3xf32, #tpu.memory_space<vmem>>, vector<1x128x3xf32>
    %1 = vector.shape_cast %0 : vector<1x128x3xf32> to vector<128x3xf32>
    %2 = vector.extract_strided_slice %1 {offsets = [0, 0], sizes = [128, 1], strides = [1, 1]} : vector<128x3xf32> to vector<128x1xf32>
    %c0_2 = arith.constant 0 : index
    %c0_3 = arith.constant 0 : index
    %3 = vector.load %arg3[%c0_2, %c0_3] : memref<3x64xf32, #tpu.memory_space<vmem>>, vector<1x64xf32>
    %4 = vector.broadcast %2 : vector<128x1xf32> to vector<128x64xf32>
    %5 = vector.broadcast %3 : vector<1x64xf32> to vector<128x64xf32>
    %6 = arith.mulf %4, %5 : vector<128x64xf32>
    %7 = vector.extract_strided_slice %1 {offsets = [0, 1], sizes = [128, 1], strides = [1, 1]} : vector<128x3xf32> to vector<128x1xf32>
    %c1 = arith.constant 1 : index
    %c0_4 = arith.constant 0 : index
    %8 = vector.load %arg3[%c1, %c0_4] : memref<3x64xf32, #tpu.memory_space<vmem>>, vector<1x64xf32>
    %9 = vector.broadcast %7 : vector<128x1xf32> to vector<128x64xf32>
    %10 = vector.broadcast %8 : vector<1x64xf32> to vector<128x64xf32>
    %11 = arith.mulf %9, %10 : vector<128x64xf32>
    %12 = arith.addf %6, %11 : vector<128x64xf32>
    %13 = vector.extract_strided_slice %1 {offsets = [0, 2], sizes = [128, 1], strides = [1, 1]} : vector<128x3xf32> to vector<128x1xf32>
    %c2 = arith.constant 2 : index
    %c0_5 = arith.constant 0 : index
    %14 = vector.load %arg3[%c2, %c0_5] : memref<3x64xf32, #tpu.memory_space<vmem>>, vector<1x64xf32>
    %15 = vector.broadcast %13 : vector<128x1xf32> to vector<128x64xf32>
    %16 = vector.broadcast %14 : vector<1x64xf32> to vector<128x64xf32>
    %17 = arith.mulf %15, %16 : vector<128x64xf32>
    %18 = arith.addf %12, %17 : vector<128x64xf32>
    %c0_6 = arith.constant 0 : index
    %c0_7 = arith.constant 0 : index
    %19 = vector.load %arg4[%c0_6, %c0_7] : memref<1x64xf32, #tpu.memory_space<vmem>>, vector<1x64xf32>
    %20 = vector.broadcast %19 : vector<1x64xf32> to vector<128x64xf32>
    %21 = arith.mulf %18, %20 : vector<128x64xf32>
    %c0_8 = arith.constant 0 : index
    %c0_9 = arith.constant 0 : index
    %22 = vector.load %arg5[%c0_8, %c0_9] : memref<1x64xf32, #tpu.memory_space<vmem>>, vector<1x64xf32>
    %23 = vector.broadcast %22 : vector<1x64xf32> to vector<128x64xf32>
    %24 = arith.addf %21, %23 : vector<128x64xf32>
    %cst = arith.constant 0.000000e+00 : f32
    %25 = vector.broadcast %cst : f32 to vector<128x64xf32>
    %26 = arith.maximumf %24, %25 : vector<128x64xf32>
    %27 = arith.truncf %26 : vector<128x64xf32> to vector<128x64xbf16>
    %c0_10 = arith.constant 0 : index
    %c0_11 = arith.constant 0 : index
    %28 = vector.load %arg6[%c0_10, %c0_11] : memref<64x128xbf16, #tpu.memory_space<vmem>>, vector<64x128xbf16>
    %cst_12 = arith.constant dense<0.000000e+00> : vector<128x128xf32>
    %29 = tpu.matmul %27, %28, %cst_12 {dimension_numbers = #tpu.dot_dimension_numbers<[1], [0], [0], [1], [0, 0, 1, 1], [], []>} : vector<128x64xbf16>, vector<64x128xbf16>, vector<128x128xf32> -> vector<128x128xf32>
    %c0_13 = arith.constant 0 : index
    %c0_14 = arith.constant 0 : index
    %30 = vector.load %arg7[%c0_13, %c0_14] : memref<1x128xf32, #tpu.memory_space<vmem>>, vector<1x128xf32>
    %31 = vector.broadcast %30 : vector<1x128xf32> to vector<128x128xf32>
    %32 = arith.mulf %29, %31 : vector<128x128xf32>
    %c0_15 = arith.constant 0 : index
    %c0_16 = arith.constant 0 : index
    %33 = vector.load %arg8[%c0_15, %c0_16] : memref<1x128xf32, #tpu.memory_space<vmem>>, vector<1x128xf32>
    %34 = vector.broadcast %33 : vector<1x128xf32> to vector<128x128xf32>
    %35 = arith.addf %32, %34 : vector<128x128xf32>
    %cst_17 = arith.constant 0.000000e+00 : f32
    %36 = vector.broadcast %cst_17 : f32 to vector<128x128xf32>
    %37 = arith.maximumf %35, %36 : vector<128x128xf32>
    %38 = arith.truncf %37 : vector<128x128xf32> to vector<128x128xbf16>
    %c0_18 = arith.constant 0 : index
    %c0_19 = arith.constant 0 : index
    %39 = vector.load %arg9[%c0_18, %c0_19] : memref<128x1024xbf16, #tpu.memory_space<vmem>>, vector<128x1024xbf16>
    %cst_20 = arith.constant dense<0.000000e+00> : vector<128x1024xf32>
    %40 = tpu.matmul %38, %39, %cst_20 {dimension_numbers = #tpu.dot_dimension_numbers<[1], [0], [0], [1], [0, 0, 1, 1], [], []>} : vector<128x128xbf16>, vector<128x1024xbf16>, vector<128x1024xf32> -> vector<128x1024xf32>
    %c0_21 = arith.constant 0 : index
    %c0_22 = arith.constant 0 : index
    %41 = vector.load %arg10[%c0_21, %c0_22] : memref<1x1024xf32, #tpu.memory_space<vmem>>, vector<1x1024xf32>
    %42 = vector.broadcast %41 : vector<1x1024xf32> to vector<128x1024xf32>
    %43 = arith.mulf %40, %42 : vector<128x1024xf32>
    %c0_23 = arith.constant 0 : index
    %c0_24 = arith.constant 0 : index
    %44 = vector.load %arg11[%c0_23, %c0_24] : memref<1x1024xf32, #tpu.memory_space<vmem>>, vector<1x1024xf32>
    %45 = vector.broadcast %44 : vector<1x1024xf32> to vector<128x1024xf32>
    %46 = arith.addf %43, %45 : vector<128x1024xf32>
    %cst_25 = arith.constant 0.000000e+00 : f32
    %47 = vector.broadcast %cst_25 : f32 to vector<128x1024xf32>
    %48 = arith.maximumf %46, %47 : vector<128x1024xf32>
    %cst_26 = arith.constant dense<0xFF800000> : vector<1024xf32>
    %49 = vector.multi_reduction <maximumf>, %48, %cst_26 [0] : vector<128x1024xf32> to vector<1024xf32>
    %50 = vector.shape_cast %49 : vector<1024xf32> to vector<1x1024xf32>
    %c0_i32 = arith.constant 0 : i32
    %51 = arith.cmpi eq, %arg1, %c0_i32 : i32
    %52 = arith.extui %51 : i1 to i32
    %c0_i32_27 = arith.constant 0 : i32
    %53 = arith.cmpi ne, %52, %c0_i32_27 : i32
    scf.if %53 {
      %c0_30 = arith.constant 0 : index
      %c0_31 = arith.constant 0 : index
      %c0_32 = arith.constant 0 : index
      %57 = vector.load %arg12[%c0_30, %c0_31, %c0_32] : memref<1x1x1024xf32, #tpu.memory_space<vmem>>, vector<1x1x1024xf32>
      %58 = vector.shape_cast %57 : vector<1x1x1024xf32> to vector<1x1024xf32>
      %59 = vector.shape_cast %50 : vector<1x1024xf32> to vector<1x1x1024xf32>
      tpu.vector_store %arg12[%c0_30, %c0_31, %c0_32], %59 {strides = array<i32>} : memref<1x1x1024xf32, #tpu.memory_space<vmem>>, vector<1x1x1024xf32>,
    } else {
    }
    %c0_i32_28 = arith.constant 0 : i32
    %54 = arith.cmpi sgt, %arg1, %c0_i32_28 : i32
    %55 = arith.extui %54 : i1 to i32
    %c0_i32_29 = arith.constant 0 : i32
    %56 = arith.cmpi ne, %55, %c0_i32_29 : i32
    scf.if %56 {
      %c0_30 = arith.constant 0 : index
      %c0_31 = arith.constant 0 : index
      %c0_32 = arith.constant 0 : index
      %57 = vector.load %arg12[%c0_30, %c0_31, %c0_32] : memref<1x1x1024xf32, #tpu.memory_space<vmem>>, vector<1x1x1024xf32>
      %58 = vector.shape_cast %57 : vector<1x1x1024xf32> to vector<1x1024xf32>
      %59 = arith.maximumf %58, %50 : vector<1x1024xf32>
      %c0_33 = arith.constant 0 : index
      %c0_34 = arith.constant 0 : index
      %c0_35 = arith.constant 0 : index
      %60 = vector.load %arg12[%c0_33, %c0_34, %c0_35] : memref<1x1x1024xf32, #tpu.memory_space<vmem>>, vector<1x1x1024xf32>
      %61 = vector.shape_cast %60 : vector<1x1x1024xf32> to vector<1x1024xf32>
      %62 = vector.shape_cast %59 : vector<1x1024xf32> to vector<1x1x1024xf32>
      tpu.vector_store %arg12[%c0_33, %c0_34, %c0_35], %62 {strides = array<i32>} : memref<1x1x1024xf32, #tpu.memory_space<vmem>>, vector<1x1x1024xf32>,
    } else {
    }
    return
  }
  func.func @transform_0(%arg0: i32, %arg1: i32) -> (i32, i32, i32) {
    %c0_i32 = arith.constant 0 : i32
    %c0_i32_0 = arith.constant 0 : i32
    return %arg0, %arg1, %c0_i32 : i32, i32, i32
  }
  func.func @transform_1(%arg0: i32, %arg1: i32) -> (i32, i32) {
    %c0_i32 = arith.constant 0 : i32
    %c0_i32_0 = arith.constant 0 : i32
    %c0_i32_1 = arith.constant 0 : i32
    return %c0_i32, %c0_i32_0 : i32, i32
  }
  func.func @transform_2(%arg0: i32, %arg1: i32) -> (i32, i32) {
    %c0_i32 = arith.constant 0 : i32
    %c0_i32_0 = arith.constant 0 : i32
    %c0_i32_1 = arith.constant 0 : i32
    return %c0_i32, %c0_i32_0 : i32, i32
  }
  func.func @transform_3(%arg0: i32, %arg1: i32) -> (i32, i32) {
    %c0_i32 = arith.constant 0 : i32
    %c0_i32_0 = arith.constant 0 : i32
    %c0_i32_1 = arith.constant 0 : i32
    return %c0_i32, %c0_i32_0 : i32, i32
  }
  func.func @transform_4(%arg0: i32, %arg1: i32) -> (i32, i32) {
    %c0_i32 = arith.constant 0 : i32
    %c0_i32_0 = arith.constant 0 : i32
    %c0_i32_1 = arith.constant 0 : i32
    return %c0_i32, %c0_i32_0 : i32, i32
  }
  func.func @transform_5(%arg0: i32, %arg1: i32) -> (i32, i32) {
    %c0_i32 = arith.constant 0 : i32
    %c0_i32_0 = arith.constant 0 : i32
    %c0_i32_1 = arith.constant 0 : i32
    return %c0_i32, %c0_i32_0 : i32, i32
  }
  func.func @transform_6(%arg0: i32, %arg1: i32) -> (i32, i32) {
    %c0_i32 = arith.constant 0 : i32
    %c0_i32_0 = arith.constant 0 : i32
    %c0_i32_1 = arith.constant 0 : i32
    return %c0_i32, %c0_i32_0 : i32, i32
  }
  func.func @transform_7(%arg0: i32, %arg1: i32) -> (i32, i32) {
    %c0_i32 = arith.constant 0 : i32
    %c0_i32_0 = arith.constant 0 : i32
    %c0_i32_1 = arith.constant 0 : i32
    return %c0_i32, %c0_i32_0 : i32, i32
  }
  func.func @transform_8(%arg0: i32, %arg1: i32) -> (i32, i32) {
    %c0_i32 = arith.constant 0 : i32
    %c0_i32_0 = arith.constant 0 : i32
    %c0_i32_1 = arith.constant 0 : i32
    return %c0_i32, %c0_i32_0 : i32, i32
  }
  func.func @transform_9(%arg0: i32, %arg1: i32) -> (i32, i32) {
    %c0_i32 = arith.constant 0 : i32
    %c0_i32_0 = arith.constant 0 : i32
    %c0_i32_1 = arith.constant 0 : i32
    return %c0_i32, %c0_i32_0 : i32, i32
  }
  func.func @transform_10(%arg0: i32, %arg1: i32) -> (i32, i32, i32) {
    %c0_i32 = arith.constant 0 : i32
    %c0_i32_0 = arith.constant 0 : i32
    %c0_i32_1 = arith.constant 0 : i32
    return %arg0, %c0_i32, %c0_i32_0 : i32, i32, i32
  }
}

</mosaic_0001>

<llo_original>
// kernel: tpu_custom_call.1
$region0: #{tpu_custom_call.1}
  #allocation0 [shape = 'u32[]', space=smem, size = 0x4, offset = 0x4, fixed_abs, tag = 'smem constant byte address 0x4 - core index']
  #allocation1 [shape = 'u32[144,128]{1,0:T(1,128)}', space=vmem, size = 0x12000, scoped, tag = 'internal scratch']
  %s0 = inlined_call_operand.vmem [shape: f32[2,128,3], index: 0, kind: input, shape index: {}]
  %s1 = inlined_call_operand.vmem [shape: f32[3,64], index: 1, kind: input, shape index: {}]
  %s2 = inlined_call_operand.vmem [shape: f32[1,64], index: 2, kind: input, shape index: {}]
  %s3 = inlined_call_operand.vmem [shape: f32[1,64], index: 3, kind: input, shape index: {}]
  %s4 = inlined_call_operand.vmem [shape: bf16[64,128], index: 4, kind: input, shape index: {}]
  %s5 = inlined_call_operand.vmem [shape: f32[1,128], index: 5, kind: input, shape index: {}]
  %s6 = inlined_call_operand.vmem [shape: f32[1,128], index: 6, kind: input, shape index: {}]
  %s7 = inlined_call_operand.hbm [shape: bf16[128,1024], index: 7, kind: input, shape index: {}]
  %s8 = inlined_call_operand.vmem [shape: f32[1,1024], index: 8, kind: input, shape index: {}]
  %s9 = inlined_call_operand.vmem [shape: f32[1,1024], index: 9, kind: input, shape index: {}]
  %s10 = inlined_call_operand.hbm [shape: f32[2,1,1024], index: 10, kind: output, shape index: {}]
  %s11 = sld [smem:[#allocation0]]
  $region85: #{tpu_custom_call.1} parent=0
    _
  %s13 = ssub.s32 1, %s11
  %s14 = scalar_select 0, %s13, %s11
  $region1: #{tpu_custom_call.1} parent=0
    #allocation2 [shape = 'u8[262144]{0}', space=vmem, size = 0x40000, scoped, tag = 'input window, operand 7, single buffered']
    #allocation3 [shape = 's32[2]{0}', space=sflag, size = 0x8, scoped, tag = 'scoped memory for tpu_custom_call.1']
    #allocation4 [shape = 's32[2]{0}', space=sflag, size = 0x8, scoped, tag = 'scoped memory for tpu_custom_call.1']
    #allocation5 [shape = 'u8[8192]{0}', space=vmem, size = 0x2000, scoped, tag = 'output window, operand 0']
    %15 = vsyncpa [#allocation3], 0
    %16 = vsyncpa [#allocation4], 0
    %s17 = scalar_lea.sflag [#allocation4], 1
    %18 = vsyncpa %s17, 0
    loop: start=0, step=1, limit=4
    $region2: #{tpu_custom_call.1} parent=1 // loop_pre_header
      _
    $region3: #{tpu_custom_call.1} parent=1 // loop_header
      %s20 = sphi 0, %s24
      %p21 = scmp.ge.s32.totalorder %s20, 4
      %s27 = sphi 0, %s39
      %s28 = sphi 0, %s35
      %s29 = sphi 0, %s27
      %s30 = sphi 0, %s28
      %s31 = sphi 0, %s29
      %s32 = sphi 0, %s30
      %s44 = sphi 0, %s46
      %s47 = sphi 0, %s44
      %s48 = sphi 0, %s47
      %s64 = sphi 0, %s48
      %s68 = sphi 0, %s68
      %s70 = sphi 0, %s68
      %s71 = sphi 0, %s70
      %s85 = sphi 0, %s71
      %s89 = sphi 0, %s89
      %s91 = sphi 0, %s89
      %s92 = sphi 0, %s91
      %s106 = sphi 0, %s92
      %s110 = sphi 0, %s110
      %s112 = sphi 0, %s110
      %s113 = sphi 0, %s112
      %s127 = sphi 0, %s113
      %s131 = sphi 0, %s131
      %s133 = sphi 0, %s131
      %s134 = sphi 0, %s133
      %s148 = sphi 0, %s134
      %s152 = sphi 0, %s152
      %s154 = sphi 0, %s152
      %s155 = sphi 0, %s154
      %s169 = sphi 0, %s155
      %s173 = sphi 0, %s173
      %s175 = sphi 0, %s173
      %s176 = sphi 0, %s175
      %s190 = sphi 0, %s176
      %s194 = sphi 0, %s194
      %s196 = sphi 0, %s194
      %s197 = sphi 0, %s196
      %s211 = sphi 0, %s197
      %s215 = sphi 0, %s215
      %s217 = sphi 0, %s215
      %s218 = sphi 0, %s217
      %s232 = sphi 0, %s218
      %s236 = sphi 0, %s236
      %s238 = sphi 0, %s236
      %s239 = sphi 0, %s238
      %s253 = sphi 0, %s239
      %s259 = sphi 0, %s261
      %s262 = sphi 0, %s259
      %s263 = sphi 0, %s262
      %s279 = sphi 0, %s263
    $region4: #{tpu_custom_call.1} parent=1 // loop_header_branch
      %23 = sbr.rel (%p21) target = $region8
    $region5: #{tpu_custom_call.1} parent=1 // loop_body
      %s25 = ssub.s32 %s20, 1
      %s26 = ssub.s32 %s20, 2
      %s33 = sadd.s32 1, %s28
      %p34 = scmp.ge.s32.totalorder %s33, 1
      %s35 = scalar_select %p34, 0, %s33
      %s36 = sadd.s32 1, %s27
      %s37 = scalar_select %p34, %s36, %s27
      %p38 = scmp.ge.s32.totalorder %s37, 2
      %s39 = scalar_select %p38, 0, %s37
      %s40 = ssub.s32 %s27, %s39
      %s41 = ssub.s32 %s28, %s35
      %s42 = sor.u32 %s40, %s41
      %p43 = scmp.eq.s32.totalorder %s42, 0
      %s45 = sadd.s32 %s44, 1
      %s46 = scalar_select %p43, %s44, %s45
      %p49 = pneg %p43
      %p50 = scmp.eq.s32.totalorder %s20, 1
      %p51 = por %p49, %p50
      %p52 = scmp.ne.s32.totalorder %s44, %s47
      %p53 = scmp.eq.s32.totalorder %s20, 0
      %p54 = por %p52, %p53
      %p55 = scmp.ne.s32.totalorder %s44, %s47
      %p56 = scmp.eq.s32.totalorder %s25, 1
      %p57 = por %p55, %p56
      %p58 = scmp.ne.s32.totalorder %s47, %s48
      %p59 = scmp.eq.s32.totalorder %s25, 0
      %p60 = por %p58, %p59
      %p61 = scmp.ne.s32.totalorder %s47, %s48
      %p62 = scmp.eq.s32.totalorder %s26, 1
      %p63 = por %p61, %p62
      %p65 = scmp.ne.s32.totalorder %s48, %s64
      %p66 = scmp.eq.s32.totalorder %s26, 0
      %p67 = por %p65, %p66
      %s69 = sadd.s32 %s68, 1
      %p72 = scmp.eq.s32.totalorder %s20, 1
      %p73 = scmp.ne.s32.totalorder %s68, %s70
      %p74 = scmp.eq.s32.totalorder %s20, 0
      %p75 = por %p73, %p74
      %p76 = scmp.ne.s32.totalorder %s68, %s70
      %p77 = scmp.eq.s32.totalorder %s25, 1
      %p78 = por %p76, %p77
      %p79 = scmp.ne.s32.totalorder %s70, %s71
      %p80 = scmp.eq.s32.totalorder %s25, 0
      %p81 = por %p79, %p80
      %p82 = scmp.ne.s32.totalorder %s70, %s71
      %p83 = scmp.eq.s32.totalorder %s26, 1
      %p84 = por %p82, %p83
      %p86 = scmp.ne.s32.totalorder %s71, %s85
      %p87 = scmp.eq.s32.totalorder %s26, 0
      %p88 = por %p86, %p87
      %s90 = sadd.s32 %s89, 1
      %p93 = scmp.eq.s32.totalorder %s20, 1
      %p94 = scmp.ne.s32.totalorder %s89, %s91
      %p95 = scmp.eq.s32.totalorder %s20, 0
      %p96 = por %p94, %p95
      %p97 = scmp.ne.s32.totalorder %s89, %s91
      %p98 = scmp.eq.s32.totalorder %s25, 1
      %p99 = por %p97, %p98
      %p100 = scmp.ne.s32.totalorder %s91, %s92
      %p101 = scmp.eq.s32.totalorder %s25, 0
      %p102 = por %p100, %p101
      %p103 = scmp.ne.s32.totalorder %s91, %s92
      %p104 = scmp.eq.s32.totalorder %s26, 1
      %p105 = por %p103, %p104
      %p107 = scmp.ne.s32.totalorder %s92, %s106
      %p108 = scmp.eq.s32.totalorder %s26, 0
      %p109 = por %p107, %p108
      %s111 = sadd.s32 %s110, 1
      %p114 = scmp.eq.s32.totalorder %s20, 1
      %p115 = scmp.ne.s32.totalorder %s110, %s112
      %p116 = scmp.eq.s32.totalorder %s20, 0
      %p117 = por %p115, %p116
      %p118 = scmp.ne.s32.totalorder %s110, %s112
      %p119 = scmp.eq.s32.totalorder %s25, 1
      %p120 = por %p118, %p119
      %p121 = scmp.ne.s32.totalorder %s112, %s113
      %p122 = scmp.eq.s32.totalorder %s25, 0
      %p123 = por %p121, %p122
      %p124 = scmp.ne.s32.totalorder %s112, %s113
      %p125 = scmp.eq.s32.totalorder %s26, 1
      %p126 = por %p124, %p125
      %p128 = scmp.ne.s32.totalorder %s113, %s127
      %p129 = scmp.eq.s32.totalorder %s26, 0
      %p130 = por %p128, %p129
      %s132 = sadd.s32 %s131, 1
      %p135 = scmp.eq.s32.totalorder %s20, 1
      %p136 = scmp.ne.s32.totalorder %s131, %s133
      %p137 = scmp.eq.s32.totalorder %s20, 0
      %p138 = por %p136, %p137
      %p139 = scmp.ne.s32.totalorder %s131, %s133
      %p140 = scmp.eq.s32.totalorder %s25, 1
      %p141 = por %p139, %p140
      %p142 = scmp.ne.s32.totalorder %s133, %s134
      %p143 = scmp.eq.s32.totalorder %s25, 0
      %p144 = por %p142, %p143
      %p145 = scmp.ne.s32.totalorder %s133, %s134
      %p146 = scmp.eq.s32.totalorder %s26, 1
      %p147 = por %p145, %p146
      %p149 = scmp.ne.s32.totalorder %s134, %s148
      %p150 = scmp.eq.s32.totalorder %s26, 0
      %p151 = por %p149, %p150
      %s153 = sadd.s32 %s152, 1
      %p156 = scmp.eq.s32.totalorder %s20, 1
      %p157 = scmp.ne.s32.totalorder %s152, %s154
      %p158 = scmp.eq.s32.totalorder %s20, 0
      %p159 = por %p157, %p158
      %p160 = scmp.ne.s32.totalorder %s152, %s154
      %p161 = scmp.eq.s32.totalorder %s25, 1
      %p162 = por %p160, %p161
      %p163 = scmp.ne.s32.totalorder %s154, %s155
      %p164 = scmp.eq.s32.totalorder %s25, 0
      %p165 = por %p163, %p164
      %p166 = scmp.ne.s32.totalorder %s154, %s155
      %p167 = scmp.eq.s32.totalorder %s26, 1
      %p168 = por %p166, %p167
      %p170 = scmp.ne.s32.totalorder %s155, %s169
      %p171 = scmp.eq.s32.totalorder %s26, 0
      %p172 = por %p170, %p171
      %s174 = sadd.s32 %s173, 1
      %p177 = scmp.eq.s32.totalorder %s20, 1
      %p178 = scmp.ne.s32.totalorder %s173, %s175
      %p179 = scmp.eq.s32.totalorder %s20, 0
      %p180 = por %p178, %p179
      %p181 = scmp.ne.s32.totalorder %s173, %s175
      %p182 = scmp.eq.s32.totalorder %s25, 1
      %p183 = por %p181, %p182
      %p184 = scmp.ne.s32.totalorder %s175, %s176
      %p185 = scmp.eq.s32.totalorder %s25, 0
      %p186 = por %p184, %p185
      %p187 = scmp.ne.s32.totalorder %s175, %s176
      %p188 = scmp.eq.s32.totalorder %s26, 1
      %p189 = por %p187, %p188
      %p191 = scmp.ne.s32.totalorder %s176, %s190
      %p192 = scmp.eq.s32.totalorder %s26, 0
      %p193 = por %p191, %p192
      %s195 = sadd.s32 %s194, 1
      %p198 = scmp.eq.s32.totalorder %s20, 1
      %p199 = scmp.ne.s32.totalorder %s194, %s196
      %p200 = scmp.eq.s32.totalorder %s20, 0
      %p201 = por %p199, %p200
      %p202 = scmp.ne.s32.totalorder %s194, %s196
      %p203 = scmp.eq.s32.totalorder %s25, 1
      %p204 = por %p202, %p203
      %p205 = scmp.ne.s32.totalorder %s196, %s197
      %p206 = scmp.eq.s32.totalorder %s25, 0
      %p207 = por %p205, %p206
      %p208 = scmp.ne.s32.totalorder %s196, %s197
      %p209 = scmp.eq.s32.totalorder %s26, 1
      %p210 = por %p208, %p209
      %p212 = scmp.ne.s32.totalorder %s197, %s211
      %p213 = scmp.eq.s32.totalorder %s26, 0
      %p214 = por %p212, %p213
      %s216 = sadd.s32 %s215, 1
      %p219 = scmp.eq.s32.totalorder %s20, 1
      %p220 = scmp.ne.s32.totalorder %s215, %s217
      %p221 = scmp.eq.s32.totalorder %s20, 0
      %p222 = por %p220, %p221
      %p223 = scmp.ne.s32.totalorder %s215, %s217
      %p224 = scmp.eq.s32.totalorder %s25, 1
      %p225 = por %p223, %p224
      %p226 = scmp.ne.s32.totalorder %s217, %s218
      %p227 = scmp.eq.s32.totalorder %s25, 0
      %p228 = por %p226, %p227
      %p229 = scmp.ne.s32.totalorder %s217, %s218
      %p230 = scmp.eq.s32.totalorder %s26, 1
      %p231 = por %p229, %p230
      %p233 = scmp.ne.s32.totalorder %s218, %s232
      %p234 = scmp.eq.s32.totalorder %s26, 0
      %p235 = por %p233, %p234
      %s237 = sadd.s32 %s236, 1
      %p240 = scmp.eq.s32.totalorder %s20, 1
      %p241 = scmp.ne.s32.totalorder %s236, %s238
      %p242 = scmp.eq.s32.totalorder %s20, 0
      %p243 = por %p241, %p242
      %p244 = scmp.ne.s32.totalorder %s236, %s238
      %p245 = scmp.eq.s32.totalorder %s25, 1
      %p246 = por %p244, %p245
      %p247 = scmp.ne.s32.totalorder %s238, %s239
      %p248 = scmp.eq.s32.totalorder %s25, 0
      %p249 = por %p247, %p248
      %p250 = scmp.ne.s32.totalorder %s238, %s239
      %p251 = scmp.eq.s32.totalorder %s26, 1
      %p252 = por %p250, %p251
      %p254 = scmp.ne.s32.totalorder %s239, %s253
      %p255 = scmp.eq.s32.totalorder %s26, 0
      %p256 = por %p254, %p255
      %s257 = ssub.s32 %s27, %s39
      %p258 = scmp.eq.s32.totalorder %s257, 0
      %s260 = sadd.s32 %s259, 1
      %s261 = scalar_select %p258, %s259, %s260
      %p264 = pneg %p258
      %p265 = scmp.eq.s32.totalorder %s20, 1
      %p266 = por %p264, %p265
      %p267 = scmp.ne.s32.totalorder %s259, %s262
      %p268 = scmp.eq.s32.totalorder %s20, 0
      %p269 = por %p267, %p268
      %p270 = scmp.ne.s32.totalorder %s259, %s262
      %p271 = scmp.eq.s32.totalorder %s25, 1
      %p272 = por %p270, %p271
      %p273 = scmp.ne.s32.totalorder %s262, %s263
      %p274 = scmp.eq.s32.totalorder %s25, 0
      %p275 = por %p273, %p274
      %p276 = scmp.ne.s32.totalorder %s262, %s263
      %p277 = scmp.eq.s32.totalorder %s26, 1
      %p278 = por %p276, %p277
      %p280 = scmp.ne.s32.totalorder %s263, %s279
      %p281 = scmp.eq.s32.totalorder %s26, 0
      %p282 = por %p280, %p281
      %p283 = scmp.le.s32.totalorder 1, %s20
      %p284 = scmp.lt.s32.totalorder %s20, 3
      %p285 = pnand %p283, %p284
      %p286 = pneg %p285
      // Predicated region
      $region9: #{tpu_custom_call.1} parent=5 // pred_check
        _
      $region10: #{tpu_custom_call.1} parent=5 // pred_check_branch
        %288 = sbr.rel (%p285) target = $region12
      $region11: #{tpu_custom_call.1} parent=5 // pred_region
        %s289 = ssub.s32 %s20, 1
        // Predicated region
        $region13: #{tpu_custom_call.1} parent=11 // pred_check
          %p290 = pneg %p81
        $region14: #{tpu_custom_call.1} parent=11 // pred_check_branch
          %292 = sbr.rel (%p290) target = $region16
        $region15: #{tpu_custom_call.1} parent=11 // pred_region
          _
        $region16: #{tpu_custom_call.1} parent=11 // pred_fallthru
          _
        // Predicated region
        $region17: #{tpu_custom_call.1} parent=11 // pred_check
          %p293 = pneg %p102
        $region18: #{tpu_custom_call.1} parent=11 // pred_check_branch
          %295 = sbr.rel (%p293) target = $region20
        $region19: #{tpu_custom_call.1} parent=11 // pred_region
          _
        $region20: #{tpu_custom_call.1} parent=11 // pred_fallthru
          _
        // Predicated region
        $region21: #{tpu_custom_call.1} parent=11 // pred_check
          %p296 = pneg %p123
        $region22: #{tpu_custom_call.1} parent=11 // pred_check_branch
          %298 = sbr.rel (%p296) target = $region24
        $region23: #{tpu_custom_call.1} parent=11 // pred_region
          _
        $region24: #{tpu_custom_call.1} parent=11 // pred_fallthru
          _
        // Predicated region
        $region25: #{tpu_custom_call.1} parent=11 // pred_check
          %p299 = pneg %p144
        $region26: #{tpu_custom_call.1} parent=11 // pred_check_branch
          %301 = sbr.rel (%p299) target = $region28
        $region27: #{tpu_custom_call.1} parent=11 // pred_region
          _
        $region28: #{tpu_custom_call.1} parent=11 // pred_fallthru
          _
        // Predicated region
        $region29: #{tpu_custom_call.1} parent=11 // pred_check
          %p302 = pneg %p165
        $region30: #{tpu_custom_call.1} parent=11 // pred_check_branch
          %304 = sbr.rel (%p302) target = $region32
        $region31: #{tpu_custom_call.1} parent=11 // pred_region
          _
        $region32: #{tpu_custom_call.1} parent=11 // pred_fallthru
          _
        // Predicated region
        $region33: #{tpu_custom_call.1} parent=11 // pred_check
          %p305 = pneg %p186
        $region34: #{tpu_custom_call.1} parent=11 // pred_check_branch
          %307 = sbr.rel (%p305) target = $region36
        $region35: #{tpu_custom_call.1} parent=11 // pred_region
          _
        $region36: #{tpu_custom_call.1} parent=11 // pred_fallthru
          _
        // Predicated region
        $region37: #{tpu_custom_call.1} parent=11 // pred_check
          %p308 = pneg %p207
        $region38: #{tpu_custom_call.1} parent=11 // pred_check_branch
          %310 = sbr.rel (%p308) target = $region40
        $region39: #{tpu_custom_call.1} parent=11 // pred_region
          %s312 = ssub.s32 8192, 8192
          %313 = vsyncadd [#allocation3], %s312
          %s314 = sshll.u32 [#allocation2], 4
          %s315 = int_to_ptr.vmem [resolvable:$true] %s314
          %320 = dma.hbm_to_vmem [thread:$0]  %s7, 8192, %s315, [#allocation3], 512, 512, 32
        $region40: #{tpu_custom_call.1} parent=11 // pred_fallthru
          _
        // Predicated region
        $region41: #{tpu_custom_call.1} parent=11 // pred_check
          %p321 = pneg %p228
        $region42: #{tpu_custom_call.1} parent=11 // pred_check_branch
          %323 = sbr.rel (%p321) target = $region44
        $region43: #{tpu_custom_call.1} parent=11 // pred_region
          _
        $region44: #{tpu_custom_call.1} parent=11 // pred_fallthru
          _
        // Predicated region
        $region45: #{tpu_custom_call.1} parent=11 // pred_check
          %p324 = pneg %p249
        $region46: #{tpu_custom_call.1} parent=11 // pred_check_branch
          %326 = sbr.rel (%p324) target = $region48
        $region47: #{tpu_custom_call.1} parent=11 // pred_region
          _
        $region48: #{tpu_custom_call.1} parent=11 // pred_fallthru
          _
      $region12: #{tpu_custom_call.1} parent=5 // pred_fallthru
        _
      %p327 = scmp.lt.s32.totalorder %s20, 2
      // Predicated region
      $region49: #{tpu_custom_call.1} parent=5 // pred_check
        %p328 = pneg %p327
      $region50: #{tpu_custom_call.1} parent=5 // pred_check_branch
        %330 = sbr.rel (%p328) target = $region52
      $region51: #{tpu_custom_call.1} parent=5 // pred_region
        // Predicated region
        $region53: #{tpu_custom_call.1} parent=51 // pred_check
          %p331 = pneg %p54
        $region54: #{tpu_custom_call.1} parent=51 // pred_check_branch
          %333 = sbr.rel (%p331) target = $region56
        $region55: #{tpu_custom_call.1} parent=51 // pred_region
          %s334 = smul.u32 16, %s28
          %p335 = scmp.lt.s32.totalorder %s27, 1
          %s336 = scalar_select %p335, %s27, 1
          %p337 = scmp.lt.s32.totalorder %s334, 15
          %s338 = scalar_select %p337, %s334, 15
          %s339 = smul.addr %s336, 16
          %s340 = sadd.s32 %s338, %s339
          %s341 = smul.addr %s340, 8
          %s342 = scalar_lea.vmem %s0, %s341
          %s343 = smul.u32 16, %s28
        $region56: #{tpu_custom_call.1} parent=51 // pred_fallthru
          _
      $region52: #{tpu_custom_call.1} parent=5 // pred_fallthru
        _
      %p344 = scmp.le.s32.totalorder 1, %s20
      %p345 = scmp.lt.s32.totalorder %s20, 3
      %p346 = pnand %p344, %p345
      %p347 = pneg %p346
      // Predicated region
      $region57: #{tpu_custom_call.1} parent=5 // pred_check
        _
      $region58: #{tpu_custom_call.1} parent=5 // pred_check_branch
        %349 = sbr.rel (%p346) target = $region60
      $region59: #{tpu_custom_call.1} parent=5 // pred_region
        %s350 = ssub.s32 %s20, 1
        // Predicated region
        $region61: #{tpu_custom_call.1} parent=59 // pred_check
          %p351 = pneg %p207
        $region62: #{tpu_custom_call.1} parent=59 // pred_check_branch
          %353 = sbr.rel (%p351) target = $region64
        $region63: #{tpu_custom_call.1} parent=59 // pred_region
          %354 = dma.done [#allocation3], 8192
        $region64: #{tpu_custom_call.1} parent=59 // pred_fallthru
          _
        %s355 = smul.u32 16, %s30
        %p356 = scmp.lt.s32.totalorder %s29, 1
        %s357 = scalar_select %p356, %s29, 1
        %p358 = scmp.lt.s32.totalorder %s355, 15
        %s359 = scalar_select %p358, %s355, 15
        %s360 = smul.addr %s357, 16
        %s361 = sadd.s32 %s359, %s360
        %s362 = smul.addr %s361, 8
        %s363 = scalar_lea.vmem %s0, %s362
        %p364 = pneg %p60
        %p365 = pneg %p57
        %p366 = pneg %p81
        %p367 = pneg %p78
        %p368 = pneg %p102
        %p369 = pneg %p99
        %p370 = pneg %p123
        %p371 = pneg %p120
        %p372 = pneg %p144
        %p373 = pneg %p141
        %p374 = pneg %p165
        %p375 = pneg %p162
        %p376 = pneg %p186
        %p377 = pneg %p183
        %p378 = pneg %p207
        %p379 = pneg %p204
        %p380 = pneg %p228
        %p381 = pneg %p225
        %p382 = pneg %p249
        %p383 = pneg %p246
        %p384 = pneg %p275
        %p385 = pneg %p272
        %s386 = sand.u32 %s262, 1
        %s387 = scalar_lea.sflag [#allocation4], %s386
        %s388 = sand.u32 %s262, 1
        %s389 = smul.addr %s388, 8
        %s390 = scalar_lea.vmem [#allocation5], %s389
        %s391 = smul.u32 16, %s30
        %p392 = scmp.lt.s32.totalorder %s29, 1
        %s393 = scalar_select %p392, %s29, 1
        %p394 = scmp.lt.s32.totalorder %s391, 15
        %s395 = scalar_select %p394, %s391, 15
        %s396 = smul.addr %s393, 16
        %s397 = sadd.s32 %s395, %s396
        %s398 = smul.addr %s397, 8
        %s399 = scalar_lea.vmem %s0, %s398
        %s400 = smul.u32 16, %s30
        %v402 = vld [vmem:[%s399] sm:$0xff]
        %v403 = vld [vmem:[%s399 + $0x8] sm:$0xff]
        %v404 = vld [vmem:[%s399 + $0x10] sm:$0xff]
        %v405 = vld [vmem:[%s399 + $0x18] sm:$0xff]
        %v406 = vld [vmem:[%s399 + $0x20] sm:$0xff]
        %v407 = vld [vmem:[%s399 + $0x28] sm:$0xff]
        %v408 = vld [vmem:[%s399 + $0x30] sm:$0xff]
        %v409 = vld [vmem:[%s399 + $0x38] sm:$0xff]
        %v410 = vld [vmem:[%s399 + $0x40] sm:$0xff]
        %v411 = vld [vmem:[%s399 + $0x48] sm:$0xff]
        %v412 = vld [vmem:[%s399 + $0x50] sm:$0xff]
        %v413 = vld [vmem:[%s399 + $0x58] sm:$0xff]
        %v414 = vld [vmem:[%s399 + $0x60] sm:$0xff]
        %v415 = vld [vmem:[%s399 + $0x68] sm:$0xff]
        %v416 = vld [vmem:[%s399 + $0x70] sm:$0xff]
        %v417 = vld [vmem:[%s399 + $0x78] sm:$0xff]
        %v418 = vld [vmem:[%s1] sm:$0x1]
        %420 = vset.pattern.permute.xlu0 0
        %421 = vperm.xlu0 %420, %v402
        %v422 = vpop.permute.xlu0 %421
        %425 = vset.pattern.permute.xlu0 0
        %426 = vperm.xlu0 %425, %v403
        %v427 = vpop.permute.xlu0 %426
        %430 = vset.pattern.permute.xlu0 0
        %431 = vperm.xlu0 %430, %v404
        %v432 = vpop.permute.xlu0 %431
        %435 = vset.pattern.permute.xlu0 0
        %436 = vperm.xlu0 %435, %v405
        %v437 = vpop.permute.xlu0 %436
        %440 = vset.pattern.permute.xlu0 0
        %441 = vperm.xlu0 %440, %v406
        %v442 = vpop.permute.xlu0 %441
        %445 = vset.pattern.permute.xlu0 0
        %446 = vperm.xlu0 %445, %v407
        %v447 = vpop.permute.xlu0 %446
        %450 = vset.pattern.permute.xlu0 0
        %451 = vperm.xlu0 %450, %v408
        %v452 = vpop.permute.xlu0 %451
        %455 = vset.pattern.permute.xlu0 0
        %456 = vperm.xlu0 %455, %v409
        %v457 = vpop.permute.xlu0 %456
        %460 = vset.pattern.permute.xlu0 0
        %461 = vperm.xlu0 %460, %v410
        %v462 = vpop.permute.xlu0 %461
        %465 = vset.pattern.permute.xlu0 0
        %466 = vperm.xlu0 %465, %v411
        %v467 = vpop.permute.xlu0 %466
        %470 = vset.pattern.permute.xlu0 0
        %471 = vperm.xlu0 %470, %v412
        %v472 = vpop.permute.xlu0 %471
        %475 = vset.pattern.permute.xlu0 0
        %476 = vperm.xlu0 %475, %v413
        %v477 = vpop.permute.xlu0 %476
        %480 = vset.pattern.permute.xlu0 0
        %481 = vperm.xlu0 %480, %v414
        %v482 = vpop.permute.xlu0 %481
        %485 = vset.pattern.permute.xlu0 0
        %486 = vperm.xlu0 %485, %v415
        %v487 = vpop.permute.xlu0 %486
        %490 = vset.pattern.permute.xlu0 0
        %491 = vperm.xlu0 %490, %v416
        %v492 = vpop.permute.xlu0 %491
        %495 = vset.pattern.permute.xlu0 0
        %496 = vperm.xlu0 %495, %v417
        %v497 = vpop.permute.xlu0 %496
        %v499 = vlaneseq
        %v500 = vshrl.u32 %v499, 7
        %v501 = vsub.s32 0, %v500
        %v502 = vrot.slane %v418, %v501
        %v503 = vmul.f32 %v422, %v502
        %v504 = vmul.f32 %v427, %v502
        %v505 = vmul.f32 %v432, %v502
        %v506 = vmul.f32 %v437, %v502
        %v507 = vmul.f32 %v442, %v502
        %v508 = vmul.f32 %v447, %v502
        %v509 = vmul.f32 %v452, %v502
        %v510 = vmul.f32 %v457, %v502
        %v511 = vmul.f32 %v462, %v502
        %v512 = vmul.f32 %v467, %v502
        %v513 = vmul.f32 %v472, %v502
        %v514 = vmul.f32 %v477, %v502
        %v515 = vmul.f32 %v482, %v502
        %v516 = vmul.f32 %v487, %v502
        %v517 = vmul.f32 %v492, %v502
        %v518 = vmul.f32 %v497, %v502
        %v519 = vld [vmem:[%s1 + $0x1] sm:$0x1]
        %520 = vset.pattern.permute.xlu0 1
        %521 = vperm.xlu0 %520, %v402
        %v522 = vpop.permute.xlu0 %521
        %524 = vset.pattern.permute.xlu0 1
        %525 = vperm.xlu0 %524, %v403
        %v526 = vpop.permute.xlu0 %525
        %528 = vset.pattern.permute.xlu0 1
        %529 = vperm.xlu0 %528, %v404
        %v530 = vpop.permute.xlu0 %529
        %532 = vset.pattern.permute.xlu0 1
        %533 = vperm.xlu0 %532, %v405
        %v534 = vpop.permute.xlu0 %533
        %536 = vset.pattern.permute.xlu0 1
        %537 = vperm.xlu0 %536, %v406
        %v538 = vpop.permute.xlu0 %537
        %540 = vset.pattern.permute.xlu0 1
        %541 = vperm.xlu0 %540, %v407
        %v542 = vpop.permute.xlu0 %541
        %544 = vset.pattern.permute.xlu0 1
        %545 = vperm.xlu0 %544, %v408
        %v546 = vpop.permute.xlu0 %545
        %548 = vset.pattern.permute.xlu0 1
        %549 = vperm.xlu0 %548, %v409
        %v550 = vpop.permute.xlu0 %549
        %552 = vset.pattern.permute.xlu0 1
        %553 = vperm.xlu0 %552, %v410
        %v554 = vpop.permute.xlu0 %553
        %556 = vset.pattern.permute.xlu0 1
        %557 = vperm.xlu0 %556, %v411
        %v558 = vpop.permute.xlu0 %557
        %560 = vset.pattern.permute.xlu0 1
        %561 = vperm.xlu0 %560, %v412
        %v562 = vpop.permute.xlu0 %561
        %564 = vset.pattern.permute.xlu0 1
        %565 = vperm.xlu0 %564, %v413
        %v566 = vpop.permute.xlu0 %565
        %568 = vset.pattern.permute.xlu0 1
        %569 = vperm.xlu0 %568, %v414
        %v570 = vpop.permute.xlu0 %569
        %572 = vset.pattern.permute.xlu0 1
        %573 = vperm.xlu0 %572, %v415
        %v574 = vpop.permute.xlu0 %573
        %576 = vset.pattern.permute.xlu0 1
        %577 = vperm.xlu0 %576, %v416
        %v578 = vpop.permute.xlu0 %577
        %580 = vset.pattern.permute.xlu0 1
        %581 = vperm.xlu0 %580, %v417
        %v582 = vpop.permute.xlu0 %581
        %v584 = vlaneseq
        %v585 = vshrl.u32 %v584, 7
        %v586 = vsub.s32 0, %v585
        %v587 = vrot.slane %v519, %v586
        %v588 = vmul.f32 %v522, %v587
        %v589 = vmul.f32 %v526, %v587
        %v590 = vmul.f32 %v530, %v587
        %v591 = vmul.f32 %v534, %v587
        %v592 = vmul.f32 %v538, %v587
        %v593 = vmul.f32 %v542, %v587
        %v594 = vmul.f32 %v546, %v587
        %v595 = vmul.f32 %v550, %v587
        %v596 = vmul.f32 %v554, %v587
        %v597 = vmul.f32 %v558, %v587
        %v598 = vmul.f32 %v562, %v587
        %v599 = vmul.f32 %v566, %v587
        %v600 = vmul.f32 %v570, %v587
        %v601 = vmul.f32 %v574, %v587
        %v602 = vmul.f32 %v578, %v587
        %v603 = vmul.f32 %v582, %v587
        %v604 = vadd.f32 %v503, %v588
        %v605 = vadd.f32 %v504, %v589
        %v606 = vadd.f32 %v505, %v590
        %v607 = vadd.f32 %v506, %v591
        %v608 = vadd.f32 %v507, %v592
        %v609 = vadd.f32 %v508, %v593
        %v610 = vadd.f32 %v509, %v594
        %v611 = vadd.f32 %v510, %v595
        %v612 = vadd.f32 %v511, %v596
        %v613 = vadd.f32 %v512, %v597
        %v614 = vadd.f32 %v513, %v598
        %v615 = vadd.f32 %v514, %v599
        %v616 = vadd.f32 %v515, %v600
        %v617 = vadd.f32 %v516, %v601
        %v618 = vadd.f32 %v517, %v602
        %v619 = vadd.f32 %v518, %v603
        %v620 = vld [vmem:[%s1 + $0x2] sm:$0x1]
        %621 = vset.pattern.permute.xlu0 2
        %622 = vperm.xlu0 %621, %v402
        %v623 = vpop.permute.xlu0 %622
        %625 = vset.pattern.permute.xlu0 2
        %626 = vperm.xlu0 %625, %v403
        %v627 = vpop.permute.xlu0 %626
        %629 = vset.pattern.permute.xlu0 2
        %630 = vperm.xlu0 %629, %v404
        %v631 = vpop.permute.xlu0 %630
        %633 = vset.pattern.permute.xlu0 2
        %634 = vperm.xlu0 %633, %v405
        %v635 = vpop.permute.xlu0 %634
        %637 = vset.pattern.permute.xlu0 2
        %638 = vperm.xlu0 %637, %v406
        %v639 = vpop.permute.xlu0 %638
        %641 = vset.pattern.permute.xlu0 2
        %642 = vperm.xlu0 %641, %v407
        %v643 = vpop.permute.xlu0 %642
        %645 = vset.pattern.permute.xlu0 2
        %646 = vperm.xlu0 %645, %v408
        %v647 = vpop.permute.xlu0 %646
        %649 = vset.pattern.permute.xlu0 2
        %650 = vperm.xlu0 %649, %v409
        %v651 = vpop.permute.xlu0 %650
        %653 = vset.pattern.permute.xlu0 2
        %654 = vperm.xlu0 %653, %v410
        %v655 = vpop.permute.xlu0 %654
        %657 = vset.pattern.permute.xlu0 2
        %658 = vperm.xlu0 %657, %v411
        %v659 = vpop.permute.xlu0 %658
        %661 = vset.pattern.permute.xlu0 2
        %662 = vperm.xlu0 %661, %v412
        %v663 = vpop.permute.xlu0 %662
        %665 = vset.pattern.permute.xlu0 2
        %666 = vperm.xlu0 %665, %v413
        %v667 = vpop.permute.xlu0 %666
        %669 = vset.pattern.permute.xlu0 2
        %670 = vperm.xlu0 %669, %v414
        %v671 = vpop.permute.xlu0 %670
        %673 = vset.pattern.permute.xlu0 2
        %674 = vperm.xlu0 %673, %v415
        %v675 = vpop.permute.xlu0 %674
        %677 = vset.pattern.permute.xlu0 2
        %678 = vperm.xlu0 %677, %v416
        %v679 = vpop.permute.xlu0 %678
        %681 = vset.pattern.permute.xlu0 2
        %682 = vperm.xlu0 %681, %v417
        %v683 = vpop.permute.xlu0 %682
        %v685 = vlaneseq
        %v686 = vshrl.u32 %v685, 7
        %v687 = vsub.s32 0, %v686
        %v688 = vrot.slane %v620, %v687
        %v689 = vmul.f32 %v623, %v688
        %v690 = vmul.f32 %v627, %v688
        %v691 = vmul.f32 %v631, %v688
        %v692 = vmul.f32 %v635, %v688
        %v693 = vmul.f32 %v639, %v688
        %v694 = vmul.f32 %v643, %v688
        %v695 = vmul.f32 %v647, %v688
        %v696 = vmul.f32 %v651, %v688
        %v697 = vmul.f32 %v655, %v688
        %v698 = vmul.f32 %v659, %v688
        %v699 = vmul.f32 %v663, %v688
        %v700 = vmul.f32 %v667, %v688
        %v701 = vmul.f32 %v671, %v688
        %v702 = vmul.f32 %v675, %v688
        %v703 = vmul.f32 %v679, %v688
        %v704 = vmul.f32 %v683, %v688
        %v705 = vadd.f32 %v604, %v689
        %v706 = vadd.f32 %v605, %v690
        %v707 = vadd.f32 %v606, %v691
        %v708 = vadd.f32 %v607, %v692
        %v709 = vadd.f32 %v608, %v693
        %v710 = vadd.f32 %v609, %v694
        %v711 = vadd.f32 %v610, %v695
        %v712 = vadd.f32 %v611, %v696
        %v713 = vadd.f32 %v612, %v697
        %v714 = vadd.f32 %v613, %v698
        %v715 = vadd.f32 %v614, %v699
        %v716 = vadd.f32 %v615, %v700
        %v717 = vadd.f32 %v616, %v701
        %v718 = vadd.f32 %v617, %v702
        %v719 = vadd.f32 %v618, %v703
        %v720 = vadd.f32 %v619, %v704
        %v721 = vld [vmem:[%s2] sm:$0x1]
        %v723 = vlaneseq
        %v724 = vshrl.u32 %v723, 7
        %v725 = vsub.s32 0, %v724
        %v726 = vrot.slane %v721, %v725
        %v728 = vmul.f32 %v705, %v726
        %v729 = vmul.f32 %v706, %v726
        %v730 = vmul.f32 %v707, %v726
        %v731 = vmul.f32 %v708, %v726
        %v732 = vmul.f32 %v709, %v726
        %v733 = vmul.f32 %v710, %v726
        %v734 = vmul.f32 %v711, %v726
        %v735 = vmul.f32 %v712, %v726
        %v736 = vmul.f32 %v713, %v726
        %v737 = vmul.f32 %v714, %v726
        %v738 = vmul.f32 %v715, %v726
        %v739 = vmul.f32 %v716, %v726
        %v740 = vmul.f32 %v717, %v726
        %v741 = vmul.f32 %v718, %v726
        %v742 = vmul.f32 %v719, %v726
        %v743 = vmul.f32 %v720, %v726
        %v744 = vld [vmem:[%s3] sm:$0x1]
        %v746 = vlaneseq
        %v747 = vshrl.u32 %v746, 7
        %v748 = vsub.s32 0, %v747
        %v749 = vrot.slane %v744, %v748
        %v751 = vadd.f32 %v728, %v749
        %v752 = vadd.f32 %v729, %v749
        %v753 = vadd.f32 %v730, %v749
        %v754 = vadd.f32 %v731, %v749
        %v755 = vadd.f32 %v732, %v749
        %v756 = vadd.f32 %v733, %v749
        %v757 = vadd.f32 %v734, %v749
        %v758 = vadd.f32 %v735, %v749
        %v759 = vadd.f32 %v736, %v749
        %v760 = vadd.f32 %v737, %v749
        %v761 = vadd.f32 %v738, %v749
        %v762 = vadd.f32 %v739, %v749
        %v763 = vadd.f32 %v740, %v749
        %v764 = vadd.f32 %v741, %v749
        %v765 = vadd.f32 %v742, %v749
        %v766 = vadd.f32 %v743, %v749
        %v767 = vmax.f32 %v751, 0.0
        %v768 = vmax.f32 %v752, 0.0
        %v769 = vmax.f32 %v753, 0.0
        %v770 = vmax.f32 %v754, 0.0
        %v771 = vmax.f32 %v755, 0.0
        %v772 = vmax.f32 %v756, 0.0
        %v773 = vmax.f32 %v757, 0.0
        %v774 = vmax.f32 %v758, 0.0
        %v775 = vmax.f32 %v759, 0.0
        %v776 = vmax.f32 %v760, 0.0
        %v777 = vmax.f32 %v761, 0.0
        %v778 = vmax.f32 %v762, 0.0
        %v779 = vmax.f32 %v763, 0.0
        %v780 = vmax.f32 %v764, 0.0
        %v781 = vmax.f32 %v765, 0.0
        %v782 = vmax.f32 %v766, 0.0
        %v783 = vpack.c.bf16 %v768, %v767
        %v784 = vpack.c.bf16 %v770, %v769
        %v785 = vpack.c.bf16 %v772, %v771
        %v786 = vpack.c.bf16 %v774, %v773
        %v787 = vpack.c.bf16 %v776, %v775
        %v788 = vpack.c.bf16 %v778, %v777
        %v789 = vpack.c.bf16 %v780, %v779
        %v790 = vpack.c.bf16 %v782, %v781
        %v791 = vld [vmem:[%s4] sm:$0xf]
        %v792 = vld [vmem:[%s4 + $0x4] sm:$0xf]
        %v793 = vld [vmem:[%s4 + $0x8] sm:$0xf]
        %v794 = vld [vmem:[%s4 + $0xc] sm:$0xf]
        %v795 = vld [vmem:[%s4 + $0x10] sm:$0xf]
        %v796 = vld [vmem:[%s4 + $0x14] sm:$0xf]
        %v797 = vld [vmem:[%s4 + $0x18] sm:$0xf]
        %v798 = vld [vmem:[%s4 + $0x1c] sm:$0xf]
        %v807 = vunpack.c.l.b16 %v791
        %v808 = vunpack.c.l.b16 %v792
        %v809 = vunpack.c.l.b16 %v793
        %v810 = vunpack.c.l.b16 %v794
        %v811 = vunpack.c.l.b16 %v795
        %v812 = vunpack.c.l.b16 %v796
        %v813 = vunpack.c.l.b16 %v797
        %v814 = vunpack.c.l.b16 %v798
        %v815 = vpack.c.b16 %v808, %v807
        %v816 = vpack.c.b16 %v810, %v809
        %v817 = vpack.c.b16 %v812, %v811
        %v818 = vpack.c.b16 %v814, %v813
        %vm823 = vcmask 523264
        %v825 = vsel %vm823, %v783, 0
        %v828 = vsel %vm823, %v784, 0
        %v831 = vsel %vm823, %v785, 0
        %v834 = vsel %vm823, %v786, 0
        %v837 = vsel %vm823, %v787, 0
        %v840 = vsel %vm823, %v788, 0
        %v843 = vsel %vm823, %v789, 0
        %v846 = vsel %vm823, %v790, 0
        %848 = vmatprep.subr.bf16.mxu0 0
        %849 = vmatpush1.bf16.msra.mxu0 0
        %850 = vmatprep.subr.bf16.mxu0 0
        %851 = vmatpush1.bf16.msra.mxu0 0
        %852 = vmatprep.subr.bf16.mxu0 0
        %853 = vmatpush1.bf16.msra.mxu0 0
        %854 = vmatprep.subr.bf16.mxu0 0
        %855 = vmatpush1.bf16.msra.mxu0 0
        %856 = vmatprep.subr.bf16.mxu0 0
        %857 = vmatpush1.bf16.msra.mxu0 %v818
        %858 = vmatprep.subr.bf16.mxu0 0
        %859 = vmatpush1.bf16.msra.mxu0 %v817
        %860 = vmatprep.subr.bf16.mxu0 0
        %861 = vmatpush1.bf16.msra.mxu0 %v816
        %862 = vmatprep.subr.bf16.mxu0 0
        %863 = vmatpush1.bf16.msra.mxu0 %v815
        %864 = vmatprep.subr.bf16.mxu0 0
        %865 = vmatpush2.bf16.msra.mxu0 0
        %866 = vmatprep.subr.bf16.mxu0 0
        %867 = vmatpush2.bf16.msra.mxu0 0
        %868 = vmatprep.subr.bf16.mxu0 0
        %869 = vmatpush2.bf16.msra.mxu0 0
        %870 = vmatprep.subr.bf16.mxu0 0
        %871 = vmatpush2.bf16.msra.mxu0 0
        %872 = vmatprep.subr.bf16.mxu0 0
        %873 = vmatpush2.bf16.msra.mxu0 0
        %874 = vmatprep.subr.bf16.mxu0 0
        %875 = vmatpush2.bf16.msra.mxu0 0
        %876 = vmatprep.subr.bf16.mxu0 0
        %877 = vmatpush2.bf16.msra.mxu0 0
        %878 = vmatprep.subr.bf16.mxu0 0
        %879 = vmatpush2.bf16.msra.mxu0 0
        %880 = vmatprep.mubr.bf16.mxu0 0
        %881 = vmatmul.mubr.bf16.gmra.mxu0 %v825
        %v882 = vpop.f32.mrf.mxu0
        %v883 = vadd.f32 0.0, %v882
        %v884 = vpop.f32.mrf.mxu0
        %v885 = vpop.f32.mrf.mxu0
        %v886 = vadd.f32 0.0, %v885
        %v887 = vpop.f32.mrf.mxu0
        %888 = vmatprep.mubr.bf16.mxu0 0
        %889 = vmatmul.mubr.bf16.gmra.mxu0 %v828
        %v890 = vpop.f32.mrf.mxu0
        %v891 = vadd.f32 0.0, %v890
        %v892 = vpop.f32.mrf.mxu0
        %v893 = vpop.f32.mrf.mxu0
        %v894 = vadd.f32 0.0, %v893
        %v895 = vpop.f32.mrf.mxu0
        %896 = vmatprep.mubr.bf16.mxu0 0
        %897 = vmatmul.mubr.bf16.gmra.mxu0 %v831
        %v898 = vpop.f32.mrf.mxu0
        %v899 = vadd.f32 0.0, %v898
        %v900 = vpop.f32.mrf.mxu0
        %v901 = vpop.f32.mrf.mxu0
        %v902 = vadd.f32 0.0, %v901
        %v903 = vpop.f32.mrf.mxu0
        %904 = vmatprep.mubr.bf16.mxu0 0
        %905 = vmatmul.mubr.bf16.gmra.mxu0 %v834
        %v906 = vpop.f32.mrf.mxu0
        %v907 = vadd.f32 0.0, %v906
        %v908 = vpop.f32.mrf.mxu0
        %v909 = vpop.f32.mrf.mxu0
        %v910 = vadd.f32 0.0, %v909
        %v911 = vpop.f32.mrf.mxu0
        %912 = vmatprep.mubr.bf16.mxu0 0
        %913 = vmatmul.mubr.bf16.gmra.mxu0 %v837
        %v914 = vpop.f32.mrf.mxu0
        %v915 = vadd.f32 0.0, %v914
        %v916 = vpop.f32.mrf.mxu0
        %v917 = vpop.f32.mrf.mxu0
        %v918 = vadd.f32 0.0, %v917
        %v919 = vpop.f32.mrf.mxu0
        %920 = vmatprep.mubr.bf16.mxu0 0
        %921 = vmatmul.mubr.bf16.gmra.mxu0 %v840
        %v922 = vpop.f32.mrf.mxu0
        %v923 = vadd.f32 0.0, %v922
        %v924 = vpop.f32.mrf.mxu0
        %v925 = vpop.f32.mrf.mxu0
        %v926 = vadd.f32 0.0, %v925
        %v927 = vpop.f32.mrf.mxu0
        %928 = vmatprep.mubr.bf16.mxu0 0
        %929 = vmatmul.mubr.bf16.gmra.mxu0 %v843
        %v930 = vpop.f32.mrf.mxu0
        %v931 = vadd.f32 0.0, %v930
        %v932 = vpop.f32.mrf.mxu0
        %v933 = vpop.f32.mrf.mxu0
        %v934 = vadd.f32 0.0, %v933
        %v935 = vpop.f32.mrf.mxu0
        %936 = vmatprep.mubr.bf16.mxu0 0
        %937 = vmatmul.mubr.bf16.gmra.mxu0 %v846
        %v938 = vpop.f32.mrf.mxu0
        %v939 = vadd.f32 0.0, %v938
        %v940 = vpop.f32.mrf.mxu0
        %v941 = vpop.f32.mrf.mxu0
        %v942 = vadd.f32 0.0, %v941
        %v943 = vpop.f32.mrf.mxu0
        %944 = vdwg.mxu0
        %v945 = vld [vmem:[%s5] sm:$0x1]
        %v947 = vlaneseq
        %v948 = vshrl.u32 %v947, 7
        %v949 = vsub.s32 0, %v948
        %v950 = vrot.slane %v945, %v949
        %v952 = vmul.f32 %v883, %v950
        %v953 = vmul.f32 %v886, %v950
        %v954 = vmul.f32 %v891, %v950
        %v955 = vmul.f32 %v894, %v950
        %v956 = vmul.f32 %v899, %v950
        %v957 = vmul.f32 %v902, %v950
        %v958 = vmul.f32 %v907, %v950
        %v959 = vmul.f32 %v910, %v950
        %v960 = vmul.f32 %v915, %v950
        %v961 = vmul.f32 %v918, %v950
        %v962 = vmul.f32 %v923, %v950
        %v963 = vmul.f32 %v926, %v950
        %v964 = vmul.f32 %v931, %v950
        %v965 = vmul.f32 %v934, %v950
        %v966 = vmul.f32 %v939, %v950
        %v967 = vmul.f32 %v942, %v950
        %v968 = vld [vmem:[%s6] sm:$0x1]
        %v970 = vlaneseq
        %v971 = vshrl.u32 %v970, 7
        %v972 = vsub.s32 0, %v971
        %v973 = vrot.slane %v968, %v972
        %v975 = vadd.f32 %v952, %v973
        %v976 = vadd.f32 %v953, %v973
        %v977 = vadd.f32 %v954, %v973
        %v978 = vadd.f32 %v955, %v973
        %v979 = vadd.f32 %v956, %v973
        %v980 = vadd.f32 %v957, %v973
        %v981 = vadd.f32 %v958, %v973
        %v982 = vadd.f32 %v959, %v973
        %v983 = vadd.f32 %v960, %v973
        %v984 = vadd.f32 %v961, %v973
        %v985 = vadd.f32 %v962, %v973
        %v986 = vadd.f32 %v963, %v973
        %v987 = vadd.f32 %v964, %v973
        %v988 = vadd.f32 %v965, %v973
        %v989 = vadd.f32 %v966, %v973
        %v990 = vadd.f32 %v967, %v973
        %v991 = vmax.f32 %v975, 0.0
        %v992 = vmax.f32 %v976, 0.0
        %v993 = vmax.f32 %v977, 0.0
        %v994 = vmax.f32 %v978, 0.0
        %v995 = vmax.f32 %v979, 0.0
        %v996 = vmax.f32 %v980, 0.0
        %v997 = vmax.f32 %v981, 0.0
        %v998 = vmax.f32 %v982, 0.0
        %v999 = vmax.f32 %v983, 0.0
        %v1000 = vmax.f32 %v984, 0.0
        %v1001 = vmax.f32 %v985, 0.0
        %v1002 = vmax.f32 %v986, 0.0
        %v1003 = vmax.f32 %v987, 0.0
        %v1004 = vmax.f32 %v988, 0.0
        %v1005 = vmax.f32 %v989, 0.0
        %v1006 = vmax.f32 %v990, 0.0
        %v1007 = vpack.c.bf16 %v992, %v991
        %v1008 = vpack.c.bf16 %v994, %v993
        %v1009 = vpack.c.bf16 %v996, %v995
        %v1010 = vpack.c.bf16 %v998, %v997
        %v1011 = vpack.c.bf16 %v1000, %v999
        %v1012 = vpack.c.bf16 %v1002, %v1001
        %v1013 = vpack.c.bf16 %v1004, %v1003
        %v1014 = vpack.c.bf16 %v1006, %v1005
        %v1015 = vld [vmem:[#allocation2] sm:$0xff]
        %v1016 = vld [vmem:[#allocation2 + $0x8] sm:$0xff]
        %v1017 = vld [vmem:[#allocation2 + $0x10] sm:$0xff]
        %v1018 = vld [vmem:[#allocation2 + $0x18] sm:$0xff]
        %v1019 = vld [vmem:[#allocation2 + $0x20] sm:$0xff]
        %v1020 = vld [vmem:[#allocation2 + $0x28] sm:$0xff]
        %v1021 = vld [vmem:[#allocation2 + $0x30] sm:$0xff]
        %v1022 = vld [vmem:[#allocation2 + $0x38] sm:$0xff]
        %v1023 = vld [vmem:[#allocation2 + $0x40] sm:$0xff]
        %v1024 = vld [vmem:[#allocation2 + $0x48] sm:$0xff]
        %v1025 = vld [vmem:[#allocation2 + $0x50] sm:$0xff]
        %v1026 = vld [vmem:[#allocation2 + $0x58] sm:$0xff]
        %v1027 = vld [vmem:[#allocation2 + $0x60] sm:$0xff]
        %v1028 = vld [vmem:[#allocation2 + $0x68] sm:$0xff]
        %v1029 = vld [vmem:[#allocation2 + $0x70] sm:$0xff]
        %v1030 = vld [vmem:[#allocation2 + $0x78] sm:$0xff]
        %v1031 = vld [vmem:[#allocation2 + $0x80] sm:$0xff]
        %v1032 = vld [vmem:[#allocation2 + $0x88] sm:$0xff]
        %v1033 = vld [vmem:[#allocation2 + $0x90] sm:$0xff]
        %v1034 = vld [vmem:[#allocation2 + $0x98] sm:$0xff]
        %v1035 = vld [vmem:[#allocation2 + $0xa0] sm:$0xff]
        %v1036 = vld [vmem:[#allocation2 + $0xa8] sm:$0xff]
        %v1037 = vld [vmem:[#allocation2 + $0xb0] sm:$0xff]
        %v1038 = vld [vmem:[#allocation2 + $0xb8] sm:$0xff]
        %v1039 = vld [vmem:[#allocation2 + $0xc0] sm:$0xff]
        %v1040 = vld [vmem:[#allocation2 + $0xc8] sm:$0xff]
        %v1041 = vld [vmem:[#allocation2 + $0xd0] sm:$0xff]
        %v1042 = vld [vmem:[#allocation2 + $0xd8] sm:$0xff]
        %v1043 = vld [vmem:[#allocation2 + $0xe0] sm:$0xff]
        %v1044 = vld [vmem:[#allocation2 + $0xe8] sm:$0xff]
        %v1045 = vld [vmem:[#allocation2 + $0xf0] sm:$0xff]
        %v1046 = vld [vmem:[#allocation2 + $0xf8] sm:$0xff]
        %v1047 = vld [vmem:[#allocation2 + $0x100] sm:$0xff]
        %v1048 = vld [vmem:[#allocation2 + $0x108] sm:$0xff]
        %v1049 = vld [vmem:[#allocation2 + $0x110] sm:$0xff]
        %v1050 = vld [vmem:[#allocation2 + $0x118] sm:$0xff]
        %v1051 = vld [vmem:[#allocation2 + $0x120] sm:$0xff]
        %v1052 = vld [vmem:[#allocation2 + $0x128] sm:$0xff]
        %v1053 = vld [vmem:[#allocation2 + $0x130] sm:$0xff]
        %v1054 = vld [vmem:[#allocation2 + $0x138] sm:$0xff]
        %v1055 = vld [vmem:[#allocation2 + $0x140] sm:$0xff]
        %v1056 = vld [vmem:[#allocation2 + $0x148] sm:$0xff]
        %v1057 = vld [vmem:[#allocation2 + $0x150] sm:$0xff]
        %v1058 = vld [vmem:[#allocation2 + $0x158] sm:$0xff]
        %v1059 = vld [vmem:[#allocation2 + $0x160] sm:$0xff]
        %v1060 = vld [vmem:[#allocation2 + $0x168] sm:$0xff]
        %v1061 = vld [vmem:[#allocation2 + $0x170] sm:$0xff]
        %v1062 = vld [vmem:[#allocation2 + $0x178] sm:$0xff]
        %v1063 = vld [vmem:[#allocation2 + $0x180] sm:$0xff]
        %v1064 = vld [vmem:[#allocation2 + $0x188] sm:$0xff]
        %v1065 = vld [vmem:[#allocation2 + $0x190] sm:$0xff]
        %v1066 = vld [vmem:[#allocation2 + $0x198] sm:$0xff]
        %v1067 = vld [vmem:[#allocation2 + $0x1a0] sm:$0xff]
        %v1068 = vld [vmem:[#allocation2 + $0x1a8] sm:$0xff]
        %v1069 = vld [vmem:[#allocation2 + $0x1b0] sm:$0xff]
        %v1070 = vld [vmem:[#allocation2 + $0x1b8] sm:$0xff]
        %v1071 = vld [vmem:[#allocation2 + $0x1c0] sm:$0xff]
        %v1072 = vld [vmem:[#allocation2 + $0x1c8] sm:$0xff]
        %v1073 = vld [vmem:[#allocation2 + $0x1d0] sm:$0xff]
        %v1074 = vld [vmem:[#allocation2 + $0x1d8] sm:$0xff]
        %v1075 = vld [vmem:[#allocation2 + $0x1e0] sm:$0xff]
        %v1076 = vld [vmem:[#allocation2 + $0x1e8] sm:$0xff]
        %v1077 = vld [vmem:[#allocation2 + $0x1f0] sm:$0xff]
        %v1078 = vld [vmem:[#allocation2 + $0x1f8] sm:$0xff]
        %v1143 = vunpack.c.l.b16 %v1015
        %v1144 = vunpack.c.h.b16 %v1015
        %v1145 = vunpack.c.l.b16 %v1016
        %v1146 = vunpack.c.h.b16 %v1016
        %v1147 = vunpack.c.l.b16 %v1017
        %v1148 = vunpack.c.h.b16 %v1017
        %v1149 = vunpack.c.l.b16 %v1018
        %v1150 = vunpack.c.h.b16 %v1018
        %v1151 = vunpack.c.l.b16 %v1019
        %v1152 = vunpack.c.h.b16 %v1019
        %v1153 = vunpack.c.l.b16 %v1020
        %v1154 = vunpack.c.h.b16 %v1020
        %v1155 = vunpack.c.l.b16 %v1021
        %v1156 = vunpack.c.h.b16 %v1021
        %v1157 = vunpack.c.l.b16 %v1022
        %v1158 = vunpack.c.h.b16 %v1022
        %v1159 = vunpack.c.l.b16 %v1023
        %v1160 = vunpack.c.h.b16 %v1023
        %v1161 = vunpack.c.l.b16 %v1024
        %v1162 = vunpack.c.h.b16 %v1024
        %v1163 = vunpack.c.l.b16 %v1025
        %v1164 = vunpack.c.h.b16 %v1025
        %v1165 = vunpack.c.l.b16 %v1026
        %v1166 = vunpack.c.h.b16 %v1026
        %v1167 = vunpack.c.l.b16 %v1027
        %v1168 = vunpack.c.h.b16 %v1027
        %v1169 = vunpack.c.l.b16 %v1028
        %v1170 = vunpack.c.h.b16 %v1028
        %v1171 = vunpack.c.l.b16 %v1029
        %v1172 = vunpack.c.h.b16 %v1029
        %v1173 = vunpack.c.l.b16 %v1030
        %v1174 = vunpack.c.h.b16 %v1030
        %v1175 = vunpack.c.l.b16 %v1031
        %v1176 = vunpack.c.h.b16 %v1031
        %v1177 = vunpack.c.l.b16 %v1032
        %v1178 = vunpack.c.h.b16 %v1032
        %v1179 = vunpack.c.l.b16 %v1033
        %v1180 = vunpack.c.h.b16 %v1033
        %v1181 = vunpack.c.l.b16 %v1034
        %v1182 = vunpack.c.h.b16 %v1034
        %v1183 = vunpack.c.l.b16 %v1035
        %v1184 = vunpack.c.h.b16 %v1035
        %v1185 = vunpack.c.l.b16 %v1036
        %v1186 = vunpack.c.h.b16 %v1036
        %v1187 = vunpack.c.l.b16 %v1037
        %v1188 = vunpack.c.h.b16 %v1037
        %v1189 = vunpack.c.l.b16 %v1038
        %v1190 = vunpack.c.h.b16 %v1038
        %v1191 = vunpack.c.l.b16 %v1039
        %v1192 = vunpack.c.h.b16 %v1039
        %v1193 = vunpack.c.l.b16 %v1040
        %v1194 = vunpack.c.h.b16 %v1040
        %v1195 = vunpack.c.l.b16 %v1041
        %v1196 = vunpack.c.h.b16 %v1041
        %v1197 = vunpack.c.l.b16 %v1042
        %v1198 = vunpack.c.h.b16 %v1042
        %v1199 = vunpack.c.l.b16 %v1043
        %v1200 = vunpack.c.h.b16 %v1043
        %v1201 = vunpack.c.l.b16 %v1044
        %v1202 = vunpack.c.h.b16 %v1044
        %v1203 = vunpack.c.l.b16 %v1045
        %v1204 = vunpack.c.h.b16 %v1045
        %v1205 = vunpack.c.l.b16 %v1046
        %v1206 = vunpack.c.h.b16 %v1046
        %v1207 = vunpack.c.l.b16 %v1047
        %v1208 = vunpack.c.h.b16 %v1047
        %v1209 = vunpack.c.l.b16 %v1048
        %v1210 = vunpack.c.h.b16 %v1048
        %v1211 = vunpack.c.l.b16 %v1049
        %v1212 = vunpack.c.h.b16 %v1049
        %v1213 = vunpack.c.l.b16 %v1050
        %v1214 = vunpack.c.h.b16 %v1050
        %v1215 = vunpack.c.l.b16 %v1051
        %v1216 = vunpack.c.h.b16 %v1051
        %v1217 = vunpack.c.l.b16 %v1052
        %v1218 = vunpack.c.h.b16 %v1052
        %v1219 = vunpack.c.l.b16 %v1053
        %v1220 = vunpack.c.h.b16 %v1053
        %v1221 = vunpack.c.l.b16 %v1054
        %v1222 = vunpack.c.h.b16 %v1054
        %v1223 = vunpack.c.l.b16 %v1055
        %v1224 = vunpack.c.h.b16 %v1055
        %v1225 = vunpack.c.l.b16 %v1056
        %v1226 = vunpack.c.h.b16 %v1056
        %v1227 = vunpack.c.l.b16 %v1057
        %v1228 = vunpack.c.h.b16 %v1057
        %v1229 = vunpack.c.l.b16 %v1058
        %v1230 = vunpack.c.h.b16 %v1058
        %v1231 = vunpack.c.l.b16 %v1059
        %v1232 = vunpack.c.h.b16 %v1059
        %v1233 = vunpack.c.l.b16 %v1060
        %v1234 = vunpack.c.h.b16 %v1060
        %v1235 = vunpack.c.l.b16 %v1061
        %v1236 = vunpack.c.h.b16 %v1061
        %v1237 = vunpack.c.l.b16 %v1062
        %v1238 = vunpack.c.h.b16 %v1062
        %v1239 = vunpack.c.l.b16 %v1063
        %v1240 = vunpack.c.h.b16 %v1063
        %v1241 = vunpack.c.l.b16 %v1064
        %v1242 = vunpack.c.h.b16 %v1064
        %v1243 = vunpack.c.l.b16 %v1065
        %v1244 = vunpack.c.h.b16 %v1065
        %v1245 = vunpack.c.l.b16 %v1066
        %v1246 = vunpack.c.h.b16 %v1066
        %v1247 = vunpack.c.l.b16 %v1067
        %v1248 = vunpack.c.h.b16 %v1067
        %v1249 = vunpack.c.l.b16 %v1068
        %v1250 = vunpack.c.h.b16 %v1068
        %v1251 = vunpack.c.l.b16 %v1069
        %v1252 = vunpack.c.h.b16 %v1069
        %v1253 = vunpack.c.l.b16 %v1070
        %v1254 = vunpack.c.h.b16 %v1070
        %v1255 = vunpack.c.l.b16 %v1071
        %v1256 = vunpack.c.h.b16 %v1071
        %v1257 = vunpack.c.l.b16 %v1072
        %v1258 = vunpack.c.h.b16 %v1072
        %v1259 = vunpack.c.l.b16 %v1073
        %v1260 = vunpack.c.h.b16 %v1073
        %v1261 = vunpack.c.l.b16 %v1074
        %v1262 = vunpack.c.h.b16 %v1074
        %v1263 = vunpack.c.l.b16 %v1075
        %v1264 = vunpack.c.h.b16 %v1075
        %v1265 = vunpack.c.l.b16 %v1076
        %v1266 = vunpack.c.h.b16 %v1076
        %v1267 = vunpack.c.l.b16 %v1077
        %v1268 = vunpack.c.h.b16 %v1077
        %v1269 = vunpack.c.l.b16 %v1078
        %v1270 = vunpack.c.h.b16 %v1078
        %v1271 = vpack.c.b16 %v1151, %v1143
        %v1272 = vpack.c.b16 %v1152, %v1144
        %v1273 = vpack.c.b16 %v1153, %v1145
        %v1274 = vpack.c.b16 %v1154, %v1146
        %v1275 = vpack.c.b16 %v1155, %v1147
        %v1276 = vpack.c.b16 %v1156, %v1148
        %v1277 = vpack.c.b16 %v1157, %v1149
        %v1278 = vpack.c.b16 %v1158, %v1150
        %v1279 = vpack.c.b16 %v1167, %v1159
        %v1280 = vpack.c.b16 %v1168, %v1160
        %v1281 = vpack.c.b16 %v1169, %v1161
        %v1282 = vpack.c.b16 %v1170, %v1162
        %v1283 = vpack.c.b16 %v1171, %v1163
        %v1284 = vpack.c.b16 %v1172, %v1164
        %v1285 = vpack.c.b16 %v1173, %v1165
        %v1286 = vpack.c.b16 %v1174, %v1166
        %v1287 = vpack.c.b16 %v1183, %v1175
        %v1288 = vpack.c.b16 %v1184, %v1176
        %v1289 = vpack.c.b16 %v1185, %v1177
        %v1290 = vpack.c.b16 %v1186, %v1178
        %v1291 = vpack.c.b16 %v1187, %v1179
        %v1292 = vpack.c.b16 %v1188, %v1180
        %v1293 = vpack.c.b16 %v1189, %v1181
        %v1294 = vpack.c.b16 %v1190, %v1182
        %v1295 = vpack.c.b16 %v1199, %v1191
        %v1296 = vpack.c.b16 %v1200, %v1192
        %v1297 = vpack.c.b16 %v1201, %v1193
        %v1298 = vpack.c.b16 %v1202, %v1194
        %v1299 = vpack.c.b16 %v1203, %v1195
        %v1300 = vpack.c.b16 %v1204, %v1196
        %v1301 = vpack.c.b16 %v1205, %v1197
        %v1302 = vpack.c.b16 %v1206, %v1198
        %v1303 = vpack.c.b16 %v1215, %v1207
        %v1304 = vpack.c.b16 %v1216, %v1208
        %v1305 = vpack.c.b16 %v1217, %v1209
        %v1306 = vpack.c.b16 %v1218, %v1210
        %v1307 = vpack.c.b16 %v1219, %v1211
        %v1308 = vpack.c.b16 %v1220, %v1212
        %v1309 = vpack.c.b16 %v1221, %v1213
        %v1310 = vpack.c.b16 %v1222, %v1214
        %v1311 = vpack.c.b16 %v1231, %v1223
        %v1312 = vpack.c.b16 %v1232, %v1224
        %v1313 = vpack.c.b16 %v1233, %v1225
        %v1314 = vpack.c.b16 %v1234, %v1226
        %v1315 = vpack.c.b16 %v1235, %v1227
        %v1316 = vpack.c.b16 %v1236, %v1228
        %v1317 = vpack.c.b16 %v1237, %v1229
        %v1318 = vpack.c.b16 %v1238, %v1230
        %v1319 = vpack.c.b16 %v1247, %v1239
        %v1320 = vpack.c.b16 %v1248, %v1240
        %v1321 = vpack.c.b16 %v1249, %v1241
        %v1322 = vpack.c.b16 %v1250, %v1242
        %v1323 = vpack.c.b16 %v1251, %v1243
        %v1324 = vpack.c.b16 %v1252, %v1244
        %v1325 = vpack.c.b16 %v1253, %v1245
        %v1326 = vpack.c.b16 %v1254, %v1246
        %v1327 = vpack.c.b16 %v1263, %v1255
        %v1328 = vpack.c.b16 %v1264, %v1256
        %v1329 = vpack.c.b16 %v1265, %v1257
        %v1330 = vpack.c.b16 %v1266, %v1258
        %v1331 = vpack.c.b16 %v1267, %v1259
        %v1332 = vpack.c.b16 %v1268, %v1260
        %v1333 = vpack.c.b16 %v1269, %v1261
        %v1334 = vpack.c.b16 %v1270, %v1262
        %1399 = vmatprep.subr.bf16.mxu0 %v1328
        %1400 = vmatpush1.bf16.msra.mxu0 %v1327
        %1401 = vmatprep.subr.bf16.mxu0 %v1320
        %1402 = vmatpush1.bf16.msra.mxu0 %v1319
        %1403 = vmatprep.subr.bf16.mxu0 %v1312
        %1404 = vmatpush1.bf16.msra.mxu0 %v1311
        %1405 = vmatprep.subr.bf16.mxu0 %v1304
        %1406 = vmatpush1.bf16.msra.mxu0 %v1303
        %1407 = vmatprep.subr.bf16.mxu0 %v1296
        %1408 = vmatpush1.bf16.msra.mxu0 %v1295
        %1409 = vmatprep.subr.bf16.mxu0 %v1288
        %1410 = vmatpush1.bf16.msra.mxu0 %v1287
        %1411 = vmatprep.subr.bf16.mxu0 %v1280
        %1412 = vmatpush1.bf16.msra.mxu0 %v1279
        %1413 = vmatprep.subr.bf16.mxu0 %v1272
        %1414 = vmatpush1.bf16.msra.mxu0 %v1271
        %1415 = vmatprep.subr.bf16.mxu0 0
        %1416 = vmatpush2.bf16.msra.mxu0 0
        %1417 = vmatprep.subr.bf16.mxu0 0
        %1418 = vmatpush2.bf16.msra.mxu0 0
        %1419 = vmatprep.subr.bf16.mxu0 0
        %1420 = vmatpush2.bf16.msra.mxu0 0
        %1421 = vmatprep.subr.bf16.mxu0 0
        %1422 = vmatpush2.bf16.msra.mxu0 0
        %1423 = vmatprep.subr.bf16.mxu0 0
        %1424 = vmatpush2.bf16.msra.mxu0 0
        %1425 = vmatprep.subr.bf16.mxu0 0
        %1426 = vmatpush2.bf16.msra.mxu0 0
        %1427 = vmatprep.subr.bf16.mxu0 0
        %1428 = vmatpush2.bf16.msra.mxu0 0
        %1429 = vmatprep.subr.bf16.mxu0 0
        %1430 = vmatpush2.bf16.msra.mxu0 0
        %1431 = vmatprep.mubr.bf16.mxu0 0
        %1432 = vmatmul.mubr.bf16.gmra.mxu0 %v1007
        %v1433 = vpop.f32.mrf.mxu0
        %v1434 = vadd.f32 0.0, %v1433
        %v1435 = vpop.f32.mrf.mxu0
        %v1436 = vadd.f32 0.0, %v1435
        %v1437 = vpop.f32.mrf.mxu0
        %v1438 = vadd.f32 0.0, %v1437
        %v1439 = vpop.f32.mrf.mxu0
        %v1440 = vadd.f32 0.0, %v1439
        %1441 = vmatprep.mubr.bf16.mxu0 0
        %1442 = vmatmul.mubr.bf16.gmra.mxu0 %v1008
        %v1443 = vpop.f32.mrf.mxu0
        %v1444 = vadd.f32 0.0, %v1443
        %v1445 = vpop.f32.mrf.mxu0
        %v1446 = vadd.f32 0.0, %v1445
        %v1447 = vpop.f32.mrf.mxu0
        %v1448 = vadd.f32 0.0, %v1447
        %v1449 = vpop.f32.mrf.mxu0
        %v1450 = vadd.f32 0.0, %v1449
        %1451 = vmatprep.mubr.bf16.mxu0 0
        %1452 = vmatmul.mubr.bf16.gmra.mxu0 %v1009
        %v1453 = vpop.f32.mrf.mxu0
        %v1454 = vadd.f32 0.0, %v1453
        %v1455 = vpop.f32.mrf.mxu0
        %v1456 = vadd.f32 0.0, %v1455
        %v1457 = vpop.f32.mrf.mxu0
        %v1458 = vadd.f32 0.0, %v1457
        %v1459 = vpop.f32.mrf.mxu0
        %v1460 = vadd.f32 0.0, %v1459
        %1461 = vmatprep.mubr.bf16.mxu0 0
        %1462 = vmatmul.mubr.bf16.gmra.mxu0 %v1010
        %v1463 = vpop.f32.mrf.mxu0
        %v1464 = vadd.f32 0.0, %v1463
        %v1465 = vpop.f32.mrf.mxu0
        %v1466 = vadd.f32 0.0, %v1465
        %v1467 = vpop.f32.mrf.mxu0
        %v1468 = vadd.f32 0.0, %v1467
        %v1469 = vpop.f32.mrf.mxu0
        %v1470 = vadd.f32 0.0, %v1469
        %1471 = vmatprep.mubr.bf16.mxu0 0
        %1472 = vmatmul.mubr.bf16.gmra.mxu0 %v1011
        %v1473 = vpop.f32.mrf.mxu0
        %v1474 = vadd.f32 0.0, %v1473
        %v1475 = vpop.f32.mrf.mxu0
        %v1476 = vadd.f32 0.0, %v1475
        %v1477 = vpop.f32.mrf.mxu0
        %v1478 = vadd.f32 0.0, %v1477
        %v1479 = vpop.f32.mrf.mxu0
        %v1480 = vadd.f32 0.0, %v1479
        %1481 = vmatprep.mubr.bf16.mxu0 0
        %1482 = vmatmul.mubr.bf16.gmra.mxu0 %v1012
        %v1483 = vpop.f32.mrf.mxu0
        %v1484 = vadd.f32 0.0, %v1483
        %v1485 = vpop.f32.mrf.mxu0
        %v1486 = vadd.f32 0.0, %v1485
        %v1487 = vpop.f32.mrf.mxu0
        %v1488 = vadd.f32 0.0, %v1487
        %v1489 = vpop.f32.mrf.mxu0
        %v1490 = vadd.f32 0.0, %v1489
        %1491 = vmatprep.mubr.bf16.mxu0 0
        %1492 = vmatmul.mubr.bf16.gmra.mxu0 %v1013
        %v1493 = vpop.f32.mrf.mxu0
        %v1494 = vadd.f32 0.0, %v1493
        %v1495 = vpop.f32.mrf.mxu0
        %v1496 = vadd.f32 0.0, %v1495
        %v1497 = vpop.f32.mrf.mxu0
        %v1498 = vadd.f32 0.0, %v1497
        %v1499 = vpop.f32.mrf.mxu0
        %v1500 = vadd.f32 0.0, %v1499
        %1501 = vmatprep.mubr.bf16.mxu0 0
        %1502 = vmatmul.mubr.bf16.gmra.mxu0 %v1014
        %v1503 = vpop.f32.mrf.mxu0
        %v1504 = vadd.f32 0.0, %v1503
        %v1505 = vpop.f32.mrf.mxu0
        %v1506 = vadd.f32 0.0, %v1505
        %v1507 = vpop.f32.mrf.mxu0
        %v1508 = vadd.f32 0.0, %v1507
        %v1509 = vpop.f32.mrf.mxu0
        %v1510 = vadd.f32 0.0, %v1509
        %1511 = vdwg.mxu0
        %1512 = vmatprep.subr.bf16.mxu0 %v1330
        %1513 = vmatpush1.bf16.msra.mxu0 %v1329
        %1514 = vmatprep.subr.bf16.mxu0 %v1322
        %1515 = vmatpush1.bf16.msra.mxu0 %v1321
        %1516 = vmatprep.subr.bf16.mxu0 %v1314
        %1517 = vmatpush1.bf16.msra.mxu0 %v1313
        %1518 = vmatprep.subr.bf16.mxu0 %v1306
        %1519 = vmatpush1.bf16.msra.mxu0 %v1305
        %1520 = vmatprep.subr.bf16.mxu0 %v1298
        %1521 = vmatpush1.bf16.msra.mxu0 %v1297
        %1522 = vmatprep.subr.bf16.mxu0 %v1290
        %1523 = vmatpush1.bf16.msra.mxu0 %v1289
        %1524 = vmatprep.subr.bf16.mxu0 %v1282
        %1525 = vmatpush1.bf16.msra.mxu0 %v1281
        %1526 = vmatprep.subr.bf16.mxu0 %v1274
        %1527 = vmatpush1.bf16.msra.mxu0 %v1273
        %1528 = vmatprep.subr.bf16.mxu0 0
        %1529 = vmatpush2.bf16.msra.mxu0 0
        %1530 = vmatprep.subr.bf16.mxu0 0
        %1531 = vmatpush2.bf16.msra.mxu0 0
        %1532 = vmatprep.subr.bf16.mxu0 0
        %1533 = vmatpush2.bf16.msra.mxu0 0
        %1534 = vmatprep.subr.bf16.mxu0 0
        %1535 = vmatpush2.bf16.msra.mxu0 0
        %1536 = vmatprep.subr.bf16.mxu0 0
        %1537 = vmatpush2.bf16.msra.mxu0 0
        %1538 = vmatprep.subr.bf16.mxu0 0
        %1539 = vmatpush2.bf16.msra.mxu0 0
        %1540 = vmatprep.subr.bf16.mxu0 0
        %1541 = vmatpush2.bf16.msra.mxu0 0
        %1542 = vmatprep.subr.bf16.mxu0 0
        %1543 = vmatpush2.bf16.msra.mxu0 0
        %1544 = vmatprep.mubr.bf16.mxu0 0
        %1545 = vmatmul.mubr.bf16.gmra.mxu0 %v1007
        %v1546 = vpop.f32.mrf.mxu0
        %v1547 = vadd.f32 0.0, %v1546
        %v1548 = vpop.f32.mrf.mxu0
        %v1549 = vadd.f32 0.0, %v1548
        %v1550 = vpop.f32.mrf.mxu0
        %v1551 = vadd.f32 0.0, %v1550
        %v1552 = vpop.f32.mrf.mxu0
        %v1553 = vadd.f32 0.0, %v1552
        %1554 = vmatprep.mubr.bf16.mxu0 0
        %1555 = vmatmul.mubr.bf16.gmra.mxu0 %v1008
        %v1556 = vpop.f32.mrf.mxu0
        %v1557 = vadd.f32 0.0, %v1556
        %v1558 = vpop.f32.mrf.mxu0
        %v1559 = vadd.f32 0.0, %v1558
        %v1560 = vpop.f32.mrf.mxu0
        %v1561 = vadd.f32 0.0, %v1560
        %v1562 = vpop.f32.mrf.mxu0
        %v1563 = vadd.f32 0.0, %v1562
        %1564 = vmatprep.mubr.bf16.mxu0 0
        %1565 = vmatmul.mubr.bf16.gmra.mxu0 %v1009
        %v1566 = vpop.f32.mrf.mxu0
        %v1567 = vadd.f32 0.0, %v1566
        %v1568 = vpop.f32.mrf.mxu0
        %v1569 = vadd.f32 0.0, %v1568
        %v1570 = vpop.f32.mrf.mxu0
        %v1571 = vadd.f32 0.0, %v1570
        %v1572 = vpop.f32.mrf.mxu0
        %v1573 = vadd.f32 0.0, %v1572
        %1574 = vmatprep.mubr.bf16.mxu0 0
        %1575 = vmatmul.mubr.bf16.gmra.mxu0 %v1010
        %v1576 = vpop.f32.mrf.mxu0
        %v1577 = vadd.f32 0.0, %v1576
        %v1578 = vpop.f32.mrf.mxu0
        %v1579 = vadd.f32 0.0, %v1578
        %v1580 = vpop.f32.mrf.mxu0
        %v1581 = vadd.f32 0.0, %v1580
        %v1582 = vpop.f32.mrf.mxu0
        %v1583 = vadd.f32 0.0, %v1582
        %1584 = vmatprep.mubr.bf16.mxu0 0
        %1585 = vmatmul.mubr.bf16.gmra.mxu0 %v1011
        %v1586 = vpop.f32.mrf.mxu0
        %v1587 = vadd.f32 0.0, %v1586
        %v1588 = vpop.f32.mrf.mxu0
        %v1589 = vadd.f32 0.0, %v1588
        %v1590 = vpop.f32.mrf.mxu0
        %v1591 = vadd.f32 0.0, %v1590
        %v1592 = vpop.f32.mrf.mxu0
        %v1593 = vadd.f32 0.0, %v1592
        %1594 = vmatprep.mubr.bf16.mxu0 0
        %1595 = vmatmul.mubr.bf16.gmra.mxu0 %v1012
        %v1596 = vpop.f32.mrf.mxu0
        %v1597 = vadd.f32 0.0, %v1596
        %v1598 = vpop.f32.mrf.mxu0
        %v1599 = vadd.f32 0.0, %v1598
        %v1600 = vpop.f32.mrf.mxu0
        %v1601 = vadd.f32 0.0, %v1600
        %v1602 = vpop.f32.mrf.mxu0
        %v1603 = vadd.f32 0.0, %v1602
        %1604 = vmatprep.mubr.bf16.mxu0 0
        %1605 = vmatmul.mubr.bf16.gmra.mxu0 %v1013
        %v1606 = vpop.f32.mrf.mxu0
        %v1607 = vadd.f32 0.0, %v1606
        %v1608 = vpop.f32.mrf.mxu0
        %v1609 = vadd.f32 0.0, %v1608
        %v1610 = vpop.f32.mrf.mxu0
        %v1611 = vadd.f32 0.0, %v1610
        %v1612 = vpop.f32.mrf.mxu0
        %v1613 = vadd.f32 0.0, %v1612
        %1614 = vmatprep.mubr.bf16.mxu0 0
        %1615 = vmatmul.mubr.bf16.gmra.mxu0 %v1014
        %v1616 = vpop.f32.mrf.mxu0
        %v1617 = vadd.f32 0.0, %v1616
        %v1618 = vpop.f32.mrf.mxu0
        %v1619 = vadd.f32 0.0, %v1618
        %v1620 = vpop.f32.mrf.mxu0
        %v1621 = vadd.f32 0.0, %v1620
        %v1622 = vpop.f32.mrf.mxu0
        %v1623 = vadd.f32 0.0, %v1622
        %1624 = vdwg.mxu0
        %1625 = vmatprep.subr.bf16.mxu0 %v1332
        %1626 = vmatpush1.bf16.msra.mxu0 %v1331
        %1627 = vmatprep.subr.bf16.mxu0 %v1324
        %1628 = vmatpush1.bf16.msra.mxu0 %v1323
        %1629 = vmatprep.subr.bf16.mxu0 %v1316
        %1630 = vmatpush1.bf16.msra.mxu0 %v1315
        %1631 = vmatprep.subr.bf16.mxu0 %v1308
        %1632 = vmatpush1.bf16.msra.mxu0 %v1307
        %1633 = vmatprep.subr.bf16.mxu0 %v1300
        %1634 = vmatpush1.bf16.msra.mxu0 %v1299
        %1635 = vmatprep.subr.bf16.mxu0 %v1292
        %1636 = vmatpush1.bf16.msra.mxu0 %v1291
        %1637 = vmatprep.subr.bf16.mxu0 %v1284
        %1638 = vmatpush1.bf16.msra.mxu0 %v1283
        %1639 = vmatprep.subr.bf16.mxu0 %v1276
        %1640 = vmatpush1.bf16.msra.mxu0 %v1275
        %1641 = vmatprep.subr.bf16.mxu0 0
        %1642 = vmatpush2.bf16.msra.mxu0 0
        %1643 = vmatprep.subr.bf16.mxu0 0
        %1644 = vmatpush2.bf16.msra.mxu0 0
        %1645 = vmatprep.subr.bf16.mxu0 0
        %1646 = vmatpush2.bf16.msra.mxu0 0
        %1647 = vmatprep.subr.bf16.mxu0 0
        %1648 = vmatpush2.bf16.msra.mxu0 0
        %1649 = vmatprep.subr.bf16.mxu0 0
        %1650 = vmatpush2.bf16.msra.mxu0 0
        %1651 = vmatprep.subr.bf16.mxu0 0
        %1652 = vmatpush2.bf16.msra.mxu0 0
        %1653 = vmatprep.subr.bf16.mxu0 0
        %1654 = vmatpush2.bf16.msra.mxu0 0
        %1655 = vmatprep.subr.bf16.mxu0 0
        %1656 = vmatpush2.bf16.msra.mxu0 0
        %1657 = vmatprep.mubr.bf16.mxu0 0
        %1658 = vmatmul.mubr.bf16.gmra.mxu0 %v1007
        %v1659 = vpop.f32.mrf.mxu0
        %v1660 = vadd.f32 0.0, %v1659
        %v1661 = vpop.f32.mrf.mxu0
        %v1662 = vadd.f32 0.0, %v1661
        %v1663 = vpop.f32.mrf.mxu0
        %v1664 = vadd.f32 0.0, %v1663
        %v1665 = vpop.f32.mrf.mxu0
        %v1666 = vadd.f32 0.0, %v1665
        %1667 = vmatprep.mubr.bf16.mxu0 0
        %1668 = vmatmul.mubr.bf16.gmra.mxu0 %v1008
        %v1669 = vpop.f32.mrf.mxu0
        %v1670 = vadd.f32 0.0, %v1669
        %v1671 = vpop.f32.mrf.mxu0
        %v1672 = vadd.f32 0.0, %v1671
        %v1673 = vpop.f32.mrf.mxu0
        %v1674 = vadd.f32 0.0, %v1673
        %v1675 = vpop.f32.mrf.mxu0
        %v1676 = vadd.f32 0.0, %v1675
        %1677 = vmatprep.mubr.bf16.mxu0 0
        %1678 = vmatmul.mubr.bf16.gmra.mxu0 %v1009
        %v1679 = vpop.f32.mrf.mxu0
        %v1680 = vadd.f32 0.0, %v1679
        %v1681 = vpop.f32.mrf.mxu0
        %v1682 = vadd.f32 0.0, %v1681
        %v1683 = vpop.f32.mrf.mxu0
        %v1684 = vadd.f32 0.0, %v1683
        %v1685 = vpop.f32.mrf.mxu0
        %v1686 = vadd.f32 0.0, %v1685
        %1687 = vmatprep.mubr.bf16.mxu0 0
        %1688 = vmatmul.mubr.bf16.gmra.mxu0 %v1010
        %v1689 = vpop.f32.mrf.mxu0
        %v1690 = vadd.f32 0.0, %v1689
        %v1691 = vpop.f32.mrf.mxu0
        %v1692 = vadd.f32 0.0, %v1691
        %v1693 = vpop.f32.mrf.mxu0
        %v1694 = vadd.f32 0.0, %v1693
        %v1695 = vpop.f32.mrf.mxu0
        %v1696 = vadd.f32 0.0, %v1695
        %1697 = vmatprep.mubr.bf16.mxu0 0
        %1698 = vmatmul.mubr.bf16.gmra.mxu0 %v1011
        %v1699 = vpop.f32.mrf.mxu0
        %v1700 = vadd.f32 0.0, %v1699
        %v1701 = vpop.f32.mrf.mxu0
        %v1702 = vadd.f32 0.0, %v1701
        %v1703 = vpop.f32.mrf.mxu0
        %v1704 = vadd.f32 0.0, %v1703
        %v1705 = vpop.f32.mrf.mxu0
        %v1706 = vadd.f32 0.0, %v1705
        %1707 = vmatprep.mubr.bf16.mxu0 0
        %1708 = vmatmul.mubr.bf16.gmra.mxu0 %v1012
        %v1709 = vpop.f32.mrf.mxu0
        %v1710 = vadd.f32 0.0, %v1709
        %v1711 = vpop.f32.mrf.mxu0
        %v1712 = vadd.f32 0.0, %v1711
        %v1713 = vpop.f32.mrf.mxu0
        %v1714 = vadd.f32 0.0, %v1713
        %v1715 = vpop.f32.mrf.mxu0
        %v1716 = vadd.f32 0.0, %v1715
        %1717 = vmatprep.mubr.bf16.mxu0 0
        %1718 = vmatmul.mubr.bf16.gmra.mxu0 %v1013
        %v1719 = vpop.f32.mrf.mxu0
        %v1720 = vadd.f32 0.0, %v1719
        %v1721 = vpop.f32.mrf.mxu0
        %v1722 = vadd.f32 0.0, %v1721
        %v1723 = vpop.f32.mrf.mxu0
        %v1724 = vadd.f32 0.0, %v1723
        %v1725 = vpop.f32.mrf.mxu0
        %v1726 = vadd.f32 0.0, %v1725
        %1727 = vmatprep.mubr.bf16.mxu0 0
        %1728 = vmatmul.mubr.bf16.gmra.mxu0 %v1014
        %v1729 = vpop.f32.mrf.mxu0
        %v1730 = vadd.f32 0.0, %v1729
        %v1731 = vpop.f32.mrf.mxu0
        %v1732 = vadd.f32 0.0, %v1731
        %v1733 = vpop.f32.mrf.mxu0
        %v1734 = vadd.f32 0.0, %v1733
        %v1735 = vpop.f32.mrf.mxu0
        %v1736 = vadd.f32 0.0, %v1735
        %1737 = vdwg.mxu0
        %1738 = vmatprep.subr.bf16.mxu0 %v1334
        %1739 = vmatpush1.bf16.msra.mxu0 %v1333
        %1740 = vmatprep.subr.bf16.mxu0 %v1326
        %1741 = vmatpush1.bf16.msra.mxu0 %v1325
        %1742 = vmatprep.subr.bf16.mxu0 %v1318
        %1743 = vmatpush1.bf16.msra.mxu0 %v1317
        %1744 = vmatprep.subr.bf16.mxu0 %v1310
        %1745 = vmatpush1.bf16.msra.mxu0 %v1309
        %1746 = vmatprep.subr.bf16.mxu0 %v1302
        %1747 = vmatpush1.bf16.msra.mxu0 %v1301
        %1748 = vmatprep.subr.bf16.mxu0 %v1294
        %1749 = vmatpush1.bf16.msra.mxu0 %v1293
        %1750 = vmatprep.subr.bf16.mxu0 %v1286
        %1751 = vmatpush1.bf16.msra.mxu0 %v1285
        %1752 = vmatprep.subr.bf16.mxu0 %v1278
        %1753 = vmatpush1.bf16.msra.mxu0 %v1277
        %1754 = vmatprep.subr.bf16.mxu0 0
        %1755 = vmatpush2.bf16.msra.mxu0 0
        %1756 = vmatprep.subr.bf16.mxu0 0
        %1757 = vmatpush2.bf16.msra.mxu0 0
        %1758 = vmatprep.subr.bf16.mxu0 0
        %1759 = vmatpush2.bf16.msra.mxu0 0
        %1760 = vmatprep.subr.bf16.mxu0 0
        %1761 = vmatpush2.bf16.msra.mxu0 0
        %1762 = vmatprep.subr.bf16.mxu0 0
        %1763 = vmatpush2.bf16.msra.mxu0 0
        %1764 = vmatprep.subr.bf16.mxu0 0
        %1765 = vmatpush2.bf16.msra.mxu0 0
        %1766 = vmatprep.subr.bf16.mxu0 0
        %1767 = vmatpush2.bf16.msra.mxu0 0
        %1768 = vmatprep.subr.bf16.mxu0 0
        %1769 = vmatpush2.bf16.msra.mxu0 0
        %1770 = vmatprep.mubr.bf16.mxu0 0
        %1771 = vmatmul.mubr.bf16.gmra.mxu0 %v1007
        %v1772 = vpop.f32.mrf.mxu0
        %v1773 = vadd.f32 0.0, %v1772
        %v1774 = vpop.f32.mrf.mxu0
        %v1775 = vadd.f32 0.0, %v1774
        %v1776 = vpop.f32.mrf.mxu0
        %v1777 = vadd.f32 0.0, %v1776
        %v1778 = vpop.f32.mrf.mxu0
        %v1779 = vadd.f32 0.0, %v1778
        %1780 = vmatprep.mubr.bf16.mxu0 0
        %1781 = vmatmul.mubr.bf16.gmra.mxu0 %v1008
        %v1782 = vpop.f32.mrf.mxu0
        %v1783 = vadd.f32 0.0, %v1782
        %v1784 = vpop.f32.mrf.mxu0
        %v1785 = vadd.f32 0.0, %v1784
        %v1786 = vpop.f32.mrf.mxu0
        %v1787 = vadd.f32 0.0, %v1786
        %v1788 = vpop.f32.mrf.mxu0
        %v1789 = vadd.f32 0.0, %v1788
        %1790 = vmatprep.mubr.bf16.mxu0 0
        %1791 = vmatmul.mubr.bf16.gmra.mxu0 %v1009
        %v1792 = vpop.f32.mrf.mxu0
        %v1793 = vadd.f32 0.0, %v1792
        %v1794 = vpop.f32.mrf.mxu0
        %v1795 = vadd.f32 0.0, %v1794
        %v1796 = vpop.f32.mrf.mxu0
        %v1797 = vadd.f32 0.0, %v1796
        %v1798 = vpop.f32.mrf.mxu0
        %v1799 = vadd.f32 0.0, %v1798
        %1800 = vmatprep.mubr.bf16.mxu0 0
        %1801 = vmatmul.mubr.bf16.gmra.mxu0 %v1010
        %v1802 = vpop.f32.mrf.mxu0
        %v1803 = vadd.f32 0.0, %v1802
        %v1804 = vpop.f32.mrf.mxu0
        %v1805 = vadd.f32 0.0, %v1804
        %v1806 = vpop.f32.mrf.mxu0
        %v1807 = vadd.f32 0.0, %v1806
        %v1808 = vpop.f32.mrf.mxu0
        %v1809 = vadd.f32 0.0, %v1808
        %1810 = vmatprep.mubr.bf16.mxu0 0
        %1811 = vmatmul.mubr.bf16.gmra.mxu0 %v1011
        %v1812 = vpop.f32.mrf.mxu0
        %v1813 = vadd.f32 0.0, %v1812
        %v1814 = vpop.f32.mrf.mxu0
        %v1815 = vadd.f32 0.0, %v1814
        %v1816 = vpop.f32.mrf.mxu0
        %v1817 = vadd.f32 0.0, %v1816
        %v1818 = vpop.f32.mrf.mxu0
        %v1819 = vadd.f32 0.0, %v1818
        %1820 = vmatprep.mubr.bf16.mxu0 0
        %1821 = vmatmul.mubr.bf16.gmra.mxu0 %v1012
        %v1822 = vpop.f32.mrf.mxu0
        %v1823 = vadd.f32 0.0, %v1822
        %v1824 = vpop.f32.mrf.mxu0
        %v1825 = vadd.f32 0.0, %v1824
        %v1826 = vpop.f32.mrf.mxu0
        %v1827 = vadd.f32 0.0, %v1826
        %v1828 = vpop.f32.mrf.mxu0
        %v1829 = vadd.f32 0.0, %v1828
        %1830 = vmatprep.mubr.bf16.mxu0 0
        %1831 = vmatmul.mubr.bf16.gmra.mxu0 %v1013
        %v1832 = vpop.f32.mrf.mxu0
        %v1833 = vadd.f32 0.0, %v1832
        %v1834 = vpop.f32.mrf.mxu0
        %v1835 = vadd.f32 0.0, %v1834
        %v1836 = vpop.f32.mrf.mxu0
        %v1837 = vadd.f32 0.0, %v1836
        %v1838 = vpop.f32.mrf.mxu0
        %v1839 = vadd.f32 0.0, %v1838
        %1840 = vmatprep.mubr.bf16.mxu0 0
        %1841 = vmatmul.mubr.bf16.gmra.mxu0 %v1014
        %v1842 = vpop.f32.mrf.mxu0
        %v1843 = vadd.f32 0.0, %v1842
        %v1844 = vpop.f32.mrf.mxu0
        %v1845 = vadd.f32 0.0, %v1844
        %v1846 = vpop.f32.mrf.mxu0
        %v1847 = vadd.f32 0.0, %v1846
        %v1848 = vpop.f32.mrf.mxu0
        %v1849 = vadd.f32 0.0, %v1848
        %1850 = vdwg.mxu0
        %v1851 = vld [vmem:[%s8] sm:$0xff]
        %v1853 = vlaneseq
        %v1854 = vshrl.u32 %v1853, 7
        %v1855 = vsub.s32 0, %v1854
        %v1856 = vrot.slane %v1851, %v1855
        %v1857 = vlaneseq
        %v1858 = vshrl.u32 %v1857, 7
        %v1859 = vsub.s32 1, %v1858
        %v1860 = vrot.slane %v1851, %v1859
        %v1861 = vlaneseq
        %v1862 = vshrl.u32 %v1861, 7
        %v1863 = vsub.s32 2, %v1862
        %v1864 = vrot.slane %v1851, %v1863
        %v1865 = vlaneseq
        %v1866 = vshrl.u32 %v1865, 7
        %v1867 = vsub.s32 3, %v1866
        %v1868 = vrot.slane %v1851, %v1867
        %v1869 = vlaneseq
        %v1870 = vshrl.u32 %v1869, 7
        %v1871 = vsub.s32 4, %v1870
        %v1872 = vrot.slane %v1851, %v1871
        %v1873 = vlaneseq
        %v1874 = vshrl.u32 %v1873, 7
        %v1875 = vsub.s32 5, %v1874
        %v1876 = vrot.slane %v1851, %v1875
        %v1877 = vlaneseq
        %v1878 = vshrl.u32 %v1877, 7
        %v1879 = vsub.s32 6, %v1878
        %v1880 = vrot.slane %v1851, %v1879
        %v1881 = vlaneseq
        %v1882 = vshrl.u32 %v1881, 7
        %v1883 = vsub.s32 7, %v1882
        %v1884 = vrot.slane %v1851, %v1883
        %v1893 = vmul.f32 %v1434, %v1856
        %v1894 = vmul.f32 %v1436, %v1860
        %v1895 = vmul.f32 %v1547, %v1864
        %v1896 = vmul.f32 %v1549, %v1868
        %v1897 = vmul.f32 %v1660, %v1872
        %v1898 = vmul.f32 %v1662, %v1876
        %v1899 = vmul.f32 %v1773, %v1880
        %v1900 = vmul.f32 %v1775, %v1884
        %v1901 = vmul.f32 %v1438, %v1856
        %v1902 = vmul.f32 %v1440, %v1860
        %v1903 = vmul.f32 %v1551, %v1864
        %v1904 = vmul.f32 %v1553, %v1868
        %v1905 = vmul.f32 %v1664, %v1872
        %v1906 = vmul.f32 %v1666, %v1876
        %v1907 = vmul.f32 %v1777, %v1880
        %v1908 = vmul.f32 %v1779, %v1884
        %v1909 = vmul.f32 %v1444, %v1856
        %v1910 = vmul.f32 %v1446, %v1860
        %v1911 = vmul.f32 %v1557, %v1864
        %v1912 = vmul.f32 %v1559, %v1868
        %v1913 = vmul.f32 %v1670, %v1872
        %v1914 = vmul.f32 %v1672, %v1876
        %v1915 = vmul.f32 %v1783, %v1880
        %v1916 = vmul.f32 %v1785, %v1884
        %v1917 = vmul.f32 %v1448, %v1856
        %v1918 = vmul.f32 %v1450, %v1860
        %v1919 = vmul.f32 %v1561, %v1864
        %v1920 = vmul.f32 %v1563, %v1868
        %v1921 = vmul.f32 %v1674, %v1872
        %v1922 = vmul.f32 %v1676, %v1876
        %v1923 = vmul.f32 %v1787, %v1880
        %v1924 = vmul.f32 %v1789, %v1884
        %v1925 = vmul.f32 %v1454, %v1856
        %v1926 = vmul.f32 %v1456, %v1860
        %v1927 = vmul.f32 %v1567, %v1864
        %v1928 = vmul.f32 %v1569, %v1868
        %v1929 = vmul.f32 %v1680, %v1872
        %v1930 = vmul.f32 %v1682, %v1876
        %v1931 = vmul.f32 %v1793, %v1880
        %v1932 = vmul.f32 %v1795, %v1884
        %v1933 = vmul.f32 %v1458, %v1856
        %v1934 = vmul.f32 %v1460, %v1860
        %v1935 = vmul.f32 %v1571, %v1864
        %v1936 = vmul.f32 %v1573, %v1868
        %v1937 = vmul.f32 %v1684, %v1872
        %v1938 = vmul.f32 %v1686, %v1876
        %v1939 = vmul.f32 %v1797, %v1880
        %v1940 = vmul.f32 %v1799, %v1884
        %v1941 = vmul.f32 %v1464, %v1856
        %v1942 = vmul.f32 %v1466, %v1860
        %v1943 = vmul.f32 %v1577, %v1864
        %v1944 = vmul.f32 %v1579, %v1868
        %v1945 = vmul.f32 %v1690, %v1872
        %v1946 = vmul.f32 %v1692, %v1876
        %v1947 = vmul.f32 %v1803, %v1880
        %v1948 = vmul.f32 %v1805, %v1884
        %v1949 = vmul.f32 %v1468, %v1856
        %v1950 = vmul.f32 %v1470, %v1860
        %v1951 = vmul.f32 %v1581, %v1864
        %v1952 = vmul.f32 %v1583, %v1868
        %v1953 = vmul.f32 %v1694, %v1872
        %v1954 = vmul.f32 %v1696, %v1876
        %v1955 = vmul.f32 %v1807, %v1880
        %v1956 = vmul.f32 %v1809, %v1884
        %v1957 = vmul.f32 %v1474, %v1856
        %v1958 = vmul.f32 %v1476, %v1860
        %v1959 = vmul.f32 %v1587, %v1864
        %v1960 = vmul.f32 %v1589, %v1868
        %v1961 = vmul.f32 %v1700, %v1872
        %v1962 = vmul.f32 %v1702, %v1876
        %v1963 = vmul.f32 %v1813, %v1880
        %v1964 = vmul.f32 %v1815, %v1884
        %v1965 = vmul.f32 %v1478, %v1856
        %v1966 = vmul.f32 %v1480, %v1860
        %v1967 = vmul.f32 %v1591, %v1864
        %v1968 = vmul.f32 %v1593, %v1868
        %v1969 = vmul.f32 %v1704, %v1872
        %v1970 = vmul.f32 %v1706, %v1876
        %v1971 = vmul.f32 %v1817, %v1880
        %v1972 = vmul.f32 %v1819, %v1884
        %v1973 = vmul.f32 %v1484, %v1856
        %v1974 = vmul.f32 %v1486, %v1860
        %v1975 = vmul.f32 %v1597, %v1864
        %v1976 = vmul.f32 %v1599, %v1868
        %v1977 = vmul.f32 %v1710, %v1872
        %v1978 = vmul.f32 %v1712, %v1876
        %v1979 = vmul.f32 %v1823, %v1880
        %v1980 = vmul.f32 %v1825, %v1884
        %v1981 = vmul.f32 %v1488, %v1856
        %v1982 = vmul.f32 %v1490, %v1860
        %v1983 = vmul.f32 %v1601, %v1864
        %v1984 = vmul.f32 %v1603, %v1868
        %v1985 = vmul.f32 %v1714, %v1872
        %v1986 = vmul.f32 %v1716, %v1876
        %v1987 = vmul.f32 %v1827, %v1880
        %v1988 = vmul.f32 %v1829, %v1884
        %v1989 = vmul.f32 %v1494, %v1856
        %v1990 = vmul.f32 %v1496, %v1860
        %v1991 = vmul.f32 %v1607, %v1864
        %v1992 = vmul.f32 %v1609, %v1868
        %v1993 = vmul.f32 %v1720, %v1872
        %v1994 = vmul.f32 %v1722, %v1876
        %v1995 = vmul.f32 %v1833, %v1880
        %v1996 = vmul.f32 %v1835, %v1884
        %v1997 = vmul.f32 %v1498, %v1856
        %v1998 = vmul.f32 %v1500, %v1860
        %v1999 = vmul.f32 %v1611, %v1864
        %v2000 = vmul.f32 %v1613, %v1868
        %v2001 = vmul.f32 %v1724, %v1872
        %v2002 = vmul.f32 %v1726, %v1876
        %v2003 = vmul.f32 %v1837, %v1880
        %v2004 = vmul.f32 %v1839, %v1884
        %v2005 = vmul.f32 %v1504, %v1856
        %v2006 = vmul.f32 %v1506, %v1860
        %v2007 = vmul.f32 %v1617, %v1864
        %v2008 = vmul.f32 %v1619, %v1868
        %v2009 = vmul.f32 %v1730, %v1872
        %v2010 = vmul.f32 %v1732, %v1876
        %v2011 = vmul.f32 %v1843, %v1880
        %v2012 = vmul.f32 %v1845, %v1884
        %v2013 = vmul.f32 %v1508, %v1856
        %v2014 = vmul.f32 %v1510, %v1860
        %v2015 = vmul.f32 %v1621, %v1864
        %v2016 = vmul.f32 %v1623, %v1868
        %v2017 = vmul.f32 %v1734, %v1872
        %v2018 = vmul.f32 %v1736, %v1876
        %v2019 = vmul.f32 %v1847, %v1880
        %v2020 = vmul.f32 %v1849, %v1884
        %v2021 = vld [vmem:[%s9] sm:$0xff]
        %v2023 = vlaneseq
        %v2024 = vshrl.u32 %v2023, 7
        %v2025 = vsub.s32 0, %v2024
        %v2026 = vrot.slane %v2021, %v2025
        %v2027 = vlaneseq
        %v2028 = vshrl.u32 %v2027, 7
        %v2029 = vsub.s32 1, %v2028
        %v2030 = vrot.slane %v2021, %v2029
        %v2031 = vlaneseq
        %v2032 = vshrl.u32 %v2031, 7
        %v2033 = vsub.s32 2, %v2032
        %v2034 = vrot.slane %v2021, %v2033
        %v2035 = vlaneseq
        %v2036 = vshrl.u32 %v2035, 7
        %v2037 = vsub.s32 3, %v2036
        %v2038 = vrot.slane %v2021, %v2037
        %v2039 = vlaneseq
        %v2040 = vshrl.u32 %v2039, 7
        %v2041 = vsub.s32 4, %v2040
        %v2042 = vrot.slane %v2021, %v2041
        %v2043 = vlaneseq
        %v2044 = vshrl.u32 %v2043, 7
        %v2045 = vsub.s32 5, %v2044
        %v2046 = vrot.slane %v2021, %v2045
        %v2047 = vlaneseq
        %v2048 = vshrl.u32 %v2047, 7
        %v2049 = vsub.s32 6, %v2048
        %v2050 = vrot.slane %v2021, %v2049
        %v2051 = vlaneseq
        %v2052 = vshrl.u32 %v2051, 7
        %v2053 = vsub.s32 7, %v2052
        %v2054 = vrot.slane %v2021, %v2053
        %v2063 = vadd.f32 %v1893, %v2026
        %v2064 = vadd.f32 %v1894, %v2030
        %v2065 = vadd.f32 %v1895, %v2034
        %v2066 = vadd.f32 %v1896, %v2038
        %v2067 = vadd.f32 %v1897, %v2042
        %v2068 = vadd.f32 %v1898, %v2046
        %v2069 = vadd.f32 %v1899, %v2050
        %v2070 = vadd.f32 %v1900, %v2054
        %v2071 = vadd.f32 %v1901, %v2026
        %v2072 = vadd.f32 %v1902, %v2030
        %v2073 = vadd.f32 %v1903, %v2034
        %v2074 = vadd.f32 %v1904, %v2038
        %v2075 = vadd.f32 %v1905, %v2042
        %v2076 = vadd.f32 %v1906, %v2046
        %v2077 = vadd.f32 %v1907, %v2050
        %v2078 = vadd.f32 %v1908, %v2054
        %v2079 = vadd.f32 %v1909, %v2026
        %v2080 = vadd.f32 %v1910, %v2030
        %v2081 = vadd.f32 %v1911, %v2034
        %v2082 = vadd.f32 %v1912, %v2038
        %v2083 = vadd.f32 %v1913, %v2042
        %v2084 = vadd.f32 %v1914, %v2046
        %v2085 = vadd.f32 %v1915, %v2050
        %v2086 = vadd.f32 %v1916, %v2054
        %v2087 = vadd.f32 %v1917, %v2026
        %v2088 = vadd.f32 %v1918, %v2030
        %v2089 = vadd.f32 %v1919, %v2034
        %v2090 = vadd.f32 %v1920, %v2038
        %v2091 = vadd.f32 %v1921, %v2042
        %v2092 = vadd.f32 %v1922, %v2046
        %v2093 = vadd.f32 %v1923, %v2050
        %v2094 = vadd.f32 %v1924, %v2054
        %v2095 = vadd.f32 %v1925, %v2026
        %v2096 = vadd.f32 %v1926, %v2030
        %v2097 = vadd.f32 %v1927, %v2034
        %v2098 = vadd.f32 %v1928, %v2038
        %v2099 = vadd.f32 %v1929, %v2042
        %v2100 = vadd.f32 %v1930, %v2046
        %v2101 = vadd.f32 %v1931, %v2050
        %v2102 = vadd.f32 %v1932, %v2054
        %v2103 = vadd.f32 %v1933, %v2026
        %v2104 = vadd.f32 %v1934, %v2030
        %v2105 = vadd.f32 %v1935, %v2034
        %v2106 = vadd.f32 %v1936, %v2038
        %v2107 = vadd.f32 %v1937, %v2042
        %v2108 = vadd.f32 %v1938, %v2046
        %v2109 = vadd.f32 %v1939, %v2050
        %v2110 = vadd.f32 %v1940, %v2054
        %v2111 = vadd.f32 %v1941, %v2026
        %v2112 = vadd.f32 %v1942, %v2030
        %v2113 = vadd.f32 %v1943, %v2034
        %v2114 = vadd.f32 %v1944, %v2038
        %v2115 = vadd.f32 %v1945, %v2042
        %v2116 = vadd.f32 %v1946, %v2046
        %v2117 = vadd.f32 %v1947, %v2050
        %v2118 = vadd.f32 %v1948, %v2054
        %v2119 = vadd.f32 %v1949, %v2026
        %v2120 = vadd.f32 %v1950, %v2030
        %v2121 = vadd.f32 %v1951, %v2034
        %v2122 = vadd.f32 %v1952, %v2038
        %v2123 = vadd.f32 %v1953, %v2042
        %v2124 = vadd.f32 %v1954, %v2046
        %v2125 = vadd.f32 %v1955, %v2050
        %v2126 = vadd.f32 %v1956, %v2054
        %v2127 = vadd.f32 %v1957, %v2026
        %v2128 = vadd.f32 %v1958, %v2030
        %v2129 = vadd.f32 %v1959, %v2034
        %v2130 = vadd.f32 %v1960, %v2038
        %v2131 = vadd.f32 %v1961, %v2042
        %v2132 = vadd.f32 %v1962, %v2046
        %v2133 = vadd.f32 %v1963, %v2050
        %v2134 = vadd.f32 %v1964, %v2054
        %v2135 = vadd.f32 %v1965, %v2026
        %v2136 = vadd.f32 %v1966, %v2030
        %v2137 = vadd.f32 %v1967, %v2034
        %v2138 = vadd.f32 %v1968, %v2038
        %v2139 = vadd.f32 %v1969, %v2042
        %v2140 = vadd.f32 %v1970, %v2046
        %v2141 = vadd.f32 %v1971, %v2050
        %v2142 = vadd.f32 %v1972, %v2054
        %v2143 = vadd.f32 %v1973, %v2026
        %v2144 = vadd.f32 %v1974, %v2030
        %v2145 = vadd.f32 %v1975, %v2034
        %v2146 = vadd.f32 %v1976, %v2038
        %v2147 = vadd.f32 %v1977, %v2042
        %v2148 = vadd.f32 %v1978, %v2046
        %v2149 = vadd.f32 %v1979, %v2050
        %v2150 = vadd.f32 %v1980, %v2054
        %v2151 = vadd.f32 %v1981, %v2026
        %v2152 = vadd.f32 %v1982, %v2030
        %v2153 = vadd.f32 %v1983, %v2034
        %v2154 = vadd.f32 %v1984, %v2038
        %v2155 = vadd.f32 %v1985, %v2042
        %v2156 = vadd.f32 %v1986, %v2046
        %v2157 = vadd.f32 %v1987, %v2050
        %v2158 = vadd.f32 %v1988, %v2054
        %v2159 = vadd.f32 %v1989, %v2026
        %v2160 = vadd.f32 %v1990, %v2030
        %v2161 = vadd.f32 %v1991, %v2034
        %v2162 = vadd.f32 %v1992, %v2038
        %v2163 = vadd.f32 %v1993, %v2042
        %v2164 = vadd.f32 %v1994, %v2046
        %v2165 = vadd.f32 %v1995, %v2050
        %v2166 = vadd.f32 %v1996, %v2054
        %v2167 = vadd.f32 %v1997, %v2026
        %v2168 = vadd.f32 %v1998, %v2030
        %v2169 = vadd.f32 %v1999, %v2034
        %v2170 = vadd.f32 %v2000, %v2038
        %v2171 = vadd.f32 %v2001, %v2042
        %v2172 = vadd.f32 %v2002, %v2046
        %v2173 = vadd.f32 %v2003, %v2050
        %v2174 = vadd.f32 %v2004, %v2054
        %v2175 = vadd.f32 %v2005, %v2026
        %v2176 = vadd.f32 %v2006, %v2030
        %v2177 = vadd.f32 %v2007, %v2034
        %v2178 = vadd.f32 %v2008, %v2038
        %v2179 = vadd.f32 %v2009, %v2042
        %v2180 = vadd.f32 %v2010, %v2046
        %v2181 = vadd.f32 %v2011, %v2050
        %v2182 = vadd.f32 %v2012, %v2054
        %v2183 = vadd.f32 %v2013, %v2026
        %v2184 = vadd.f32 %v2014, %v2030
        %v2185 = vadd.f32 %v2015, %v2034
        %v2186 = vadd.f32 %v2016, %v2038
        %v2187 = vadd.f32 %v2017, %v2042
        %v2188 = vadd.f32 %v2018, %v2046
        %v2189 = vadd.f32 %v2019, %v2050
        %v2190 = vadd.f32 %v2020, %v2054
        %v2191 = vmax.f32 %v2063, 0.0
        %v2192 = vmax.f32 %v2064, 0.0
        %v2193 = vmax.f32 %v2065, 0.0
        %v2194 = vmax.f32 %v2066, 0.0
        %v2195 = vmax.f32 %v2067, 0.0
        %v2196 = vmax.f32 %v2068, 0.0
        %v2197 = vmax.f32 %v2069, 0.0
        %v2198 = vmax.f32 %v2070, 0.0
        %v2199 = vmax.f32 %v2071, 0.0
        %v2200 = vmax.f32 %v2072, 0.0
        %v2201 = vmax.f32 %v2073, 0.0
        %v2202 = vmax.f32 %v2074, 0.0
        %v2203 = vmax.f32 %v2075, 0.0
        %v2204 = vmax.f32 %v2076, 0.0
        %v2205 = vmax.f32 %v2077, 0.0
        %v2206 = vmax.f32 %v2078, 0.0
        %v2207 = vmax.f32 %v2079, 0.0
        %v2208 = vmax.f32 %v2080, 0.0
        %v2209 = vmax.f32 %v2081, 0.0
        %v2210 = vmax.f32 %v2082, 0.0
        %v2211 = vmax.f32 %v2083, 0.0
        %v2212 = vmax.f32 %v2084, 0.0
        %v2213 = vmax.f32 %v2085, 0.0
        %v2214 = vmax.f32 %v2086, 0.0
        %v2215 = vmax.f32 %v2087, 0.0
        %v2216 = vmax.f32 %v2088, 0.0
        %v2217 = vmax.f32 %v2089, 0.0
        %v2218 = vmax.f32 %v2090, 0.0
        %v2219 = vmax.f32 %v2091, 0.0
        %v2220 = vmax.f32 %v2092, 0.0
        %v2221 = vmax.f32 %v2093, 0.0
        %v2222 = vmax.f32 %v2094, 0.0
        %v2223 = vmax.f32 %v2095, 0.0
        %v2224 = vmax.f32 %v2096, 0.0
        %v2225 = vmax.f32 %v2097, 0.0
        %v2226 = vmax.f32 %v2098, 0.0
        %v2227 = vmax.f32 %v2099, 0.0
        %v2228 = vmax.f32 %v2100, 0.0
        %v2229 = vmax.f32 %v2101, 0.0
        %v2230 = vmax.f32 %v2102, 0.0
        %v2231 = vmax.f32 %v2103, 0.0
        %v2232 = vmax.f32 %v2104, 0.0
        %v2233 = vmax.f32 %v2105, 0.0
        %v2234 = vmax.f32 %v2106, 0.0
        %v2235 = vmax.f32 %v2107, 0.0
        %v2236 = vmax.f32 %v2108, 0.0
        %v2237 = vmax.f32 %v2109, 0.0
        %v2238 = vmax.f32 %v2110, 0.0
        %v2239 = vmax.f32 %v2111, 0.0
        %v2240 = vmax.f32 %v2112, 0.0
        %v2241 = vmax.f32 %v2113, 0.0
        %v2242 = vmax.f32 %v2114, 0.0
        %v2243 = vmax.f32 %v2115, 0.0
        %v2244 = vmax.f32 %v2116, 0.0
        %v2245 = vmax.f32 %v2117, 0.0
        %v2246 = vmax.f32 %v2118, 0.0
        %v2247 = vmax.f32 %v2119, 0.0
        %v2248 = vmax.f32 %v2120, 0.0
        %v2249 = vmax.f32 %v2121, 0.0
        %v2250 = vmax.f32 %v2122, 0.0
        %v2251 = vmax.f32 %v2123, 0.0
        %v2252 = vmax.f32 %v2124, 0.0
        %v2253 = vmax.f32 %v2125, 0.0
        %v2254 = vmax.f32 %v2126, 0.0
        %v2255 = vmax.f32 %v2127, 0.0
        %v2256 = vmax.f32 %v2128, 0.0
        %v2257 = vmax.f32 %v2129, 0.0
        %v2258 = vmax.f32 %v2130, 0.0
        %v2259 = vmax.f32 %v2131, 0.0
        %v2260 = vmax.f32 %v2132, 0.0
        %v2261 = vmax.f32 %v2133, 0.0
        %v2262 = vmax.f32 %v2134, 0.0
        %v2263 = vmax.f32 %v2135, 0.0
        %v2264 = vmax.f32 %v2136, 0.0
        %v2265 = vmax.f32 %v2137, 0.0
        %v2266 = vmax.f32 %v2138, 0.0
        %v2267 = vmax.f32 %v2139, 0.0
        %v2268 = vmax.f32 %v2140, 0.0
        %v2269 = vmax.f32 %v2141, 0.0
        %v2270 = vmax.f32 %v2142, 0.0
        %v2271 = vmax.f32 %v2143, 0.0
        %v2272 = vmax.f32 %v2144, 0.0
        %v2273 = vmax.f32 %v2145, 0.0
        %v2274 = vmax.f32 %v2146, 0.0
        %v2275 = vmax.f32 %v2147, 0.0
        %v2276 = vmax.f32 %v2148, 0.0
        %v2277 = vmax.f32 %v2149, 0.0
        %v2278 = vmax.f32 %v2150, 0.0
        %v2279 = vmax.f32 %v2151, 0.0
        %v2280 = vmax.f32 %v2152, 0.0
        %v2281 = vmax.f32 %v2153, 0.0
        %v2282 = vmax.f32 %v2154, 0.0
        %v2283 = vmax.f32 %v2155, 0.0
        %v2284 = vmax.f32 %v2156, 0.0
        %v2285 = vmax.f32 %v2157, 0.0
        %v2286 = vmax.f32 %v2158, 0.0
        %v2287 = vmax.f32 %v2159, 0.0
        %v2288 = vmax.f32 %v2160, 0.0
        %v2289 = vmax.f32 %v2161, 0.0
        %v2290 = vmax.f32 %v2162, 0.0
        %v2291 = vmax.f32 %v2163, 0.0
        %v2292 = vmax.f32 %v2164, 0.0
        %v2293 = vmax.f32 %v2165, 0.0
        %v2294 = vmax.f32 %v2166, 0.0
        %v2295 = vmax.f32 %v2167, 0.0
        %v2296 = vmax.f32 %v2168, 0.0
        %v2297 = vmax.f32 %v2169, 0.0
        %v2298 = vmax.f32 %v2170, 0.0
        %v2299 = vmax.f32 %v2171, 0.0
        %v2300 = vmax.f32 %v2172, 0.0
        %v2301 = vmax.f32 %v2173, 0.0
        %v2302 = vmax.f32 %v2174, 0.0
        %v2303 = vmax.f32 %v2175, 0.0
        %v2304 = vmax.f32 %v2176, 0.0
        %v2305 = vmax.f32 %v2177, 0.0
        %v2306 = vmax.f32 %v2178, 0.0
        %v2307 = vmax.f32 %v2179, 0.0
        %v2308 = vmax.f32 %v2180, 0.0
        %v2309 = vmax.f32 %v2181, 0.0
        %v2310 = vmax.f32 %v2182, 0.0
        %v2311 = vmax.f32 %v2183, 0.0
        %v2312 = vmax.f32 %v2184, 0.0
        %v2313 = vmax.f32 %v2185, 0.0
        %v2314 = vmax.f32 %v2186, 0.0
        %v2315 = vmax.f32 %v2187, 0.0
        %v2316 = vmax.f32 %v2188, 0.0
        %v2317 = vmax.f32 %v2189, 0.0
        %v2318 = vmax.f32 %v2190, 0.0
        %v2319 = vmax.f32 %v2191, %v2199
        %v2320 = vmax.f32 %v2319, %v2207
        %v2321 = vmax.f32 %v2320, %v2215
        %v2322 = vmax.f32 %v2321, %v2223
        %v2323 = vmax.f32 %v2322, %v2231
        %v2324 = vmax.f32 %v2323, %v2239
        %v2325 = vmax.f32 %v2324, %v2247
        %v2326 = vmax.f32 %v2325, %v2255
        %v2327 = vmax.f32 %v2326, %v2263
        %v2328 = vmax.f32 %v2327, %v2271
        %v2329 = vmax.f32 %v2328, %v2279
        %v2330 = vmax.f32 %v2329, %v2287
        %v2331 = vmax.f32 %v2330, %v2295
        %v2332 = vmax.f32 %v2331, %v2303
        %v2333 = vmax.f32 %v2332, %v2311
        %v2334 = vrot.slane %v2333, 4
        %v2335 = vmax.f32 %v2333, %v2334
        %v2336 = vrot.slane %v2335, 2
        %v2337 = vmax.f32 %v2335, %v2336
        %v2338 = vrot.slane %v2337, 1
        %v2339 = vmax.f32 %v2337, %v2338
        %v2340 = vmax.f32 %v2192, %v2200
        %v2341 = vmax.f32 %v2340, %v2208
        %v2342 = vmax.f32 %v2341, %v2216
        %v2343 = vmax.f32 %v2342, %v2224
        %v2344 = vmax.f32 %v2343, %v2232
        %v2345 = vmax.f32 %v2344, %v2240
        %v2346 = vmax.f32 %v2345, %v2248
        %v2347 = vmax.f32 %v2346, %v2256
        %v2348 = vmax.f32 %v2347, %v2264
        %v2349 = vmax.f32 %v2348, %v2272
        %v2350 = vmax.f32 %v2349, %v2280
        %v2351 = vmax.f32 %v2350, %v2288
        %v2352 = vmax.f32 %v2351, %v2296
        %v2353 = vmax.f32 %v2352, %v2304
        %v2354 = vmax.f32 %v2353, %v2312
        %v2355 = vrot.slane %v2354, 4
        %v2356 = vmax.f32 %v2354, %v2355
        %v2357 = vrot.slane %v2356, 2
        %v2358 = vmax.f32 %v2356, %v2357
        %v2359 = vrot.slane %v2358, 1
        %v2360 = vmax.f32 %v2358, %v2359
        %v2361 = vmax.f32 %v2193, %v2201
        %v2362 = vmax.f32 %v2361, %v2209
        %v2363 = vmax.f32 %v2362, %v2217
        %v2364 = vmax.f32 %v2363, %v2225
        %v2365 = vmax.f32 %v2364, %v2233
        %v2366 = vmax.f32 %v2365, %v2241
        %v2367 = vmax.f32 %v2366, %v2249
        %v2368 = vmax.f32 %v2367, %v2257
        %v2369 = vmax.f32 %v2368, %v2265
        %v2370 = vmax.f32 %v2369, %v2273
        %v2371 = vmax.f32 %v2370, %v2281
        %v2372 = vmax.f32 %v2371, %v2289
        %v2373 = vmax.f32 %v2372, %v2297
        %v2374 = vmax.f32 %v2373, %v2305
        %v2375 = vmax.f32 %v2374, %v2313
        %v2376 = vrot.slane %v2375, 4
        %v2377 = vmax.f32 %v2375, %v2376
        %v2378 = vrot.slane %v2377, 2
        %v2379 = vmax.f32 %v2377, %v2378
        %v2380 = vrot.slane %v2379, 1
        %v2381 = vmax.f32 %v2379, %v2380
        %v2382 = vmax.f32 %v2194, %v2202
        %v2383 = vmax.f32 %v2382, %v2210
        %v2384 = vmax.f32 %v2383, %v2218
        %v2385 = vmax.f32 %v2384, %v2226
        %v2386 = vmax.f32 %v2385, %v2234
        %v2387 = vmax.f32 %v2386, %v2242
        %v2388 = vmax.f32 %v2387, %v2250
        %v2389 = vmax.f32 %v2388, %v2258
        %v2390 = vmax.f32 %v2389, %v2266
        %v2391 = vmax.f32 %v2390, %v2274
        %v2392 = vmax.f32 %v2391, %v2282
        %v2393 = vmax.f32 %v2392, %v2290
        %v2394 = vmax.f32 %v2393, %v2298
        %v2395 = vmax.f32 %v2394, %v2306
        %v2396 = vmax.f32 %v2395, %v2314
        %v2397 = vrot.slane %v2396, 4
        %v2398 = vmax.f32 %v2396, %v2397
        %v2399 = vrot.slane %v2398, 2
        %v2400 = vmax.f32 %v2398, %v2399
        %v2401 = vrot.slane %v2400, 1
        %v2402 = vmax.f32 %v2400, %v2401
        %v2403 = vmax.f32 %v2195, %v2203
        %v2404 = vmax.f32 %v2403, %v2211
        %v2405 = vmax.f32 %v2404, %v2219
        %v2406 = vmax.f32 %v2405, %v2227
        %v2407 = vmax.f32 %v2406, %v2235
        %v2408 = vmax.f32 %v2407, %v2243
        %v2409 = vmax.f32 %v2408, %v2251
        %v2410 = vmax.f32 %v2409, %v2259
        %v2411 = vmax.f32 %v2410, %v2267
        %v2412 = vmax.f32 %v2411, %v2275
        %v2413 = vmax.f32 %v2412, %v2283
        %v2414 = vmax.f32 %v2413, %v2291
        %v2415 = vmax.f32 %v2414, %v2299
        %v2416 = vmax.f32 %v2415, %v2307
        %v2417 = vmax.f32 %v2416, %v2315
        %v2418 = vrot.slane %v2417, 4
        %v2419 = vmax.f32 %v2417, %v2418
        %v2420 = vrot.slane %v2419, 2
        %v2421 = vmax.f32 %v2419, %v2420
        %v2422 = vrot.slane %v2421, 1
        %v2423 = vmax.f32 %v2421, %v2422
        %v2424 = vmax.f32 %v2196, %v2204
        %v2425 = vmax.f32 %v2424, %v2212
        %v2426 = vmax.f32 %v2425, %v2220
        %v2427 = vmax.f32 %v2426, %v2228
        %v2428 = vmax.f32 %v2427, %v2236
        %v2429 = vmax.f32 %v2428, %v2244
        %v2430 = vmax.f32 %v2429, %v2252
        %v2431 = vmax.f32 %v2430, %v2260
        %v2432 = vmax.f32 %v2431, %v2268
        %v2433 = vmax.f32 %v2432, %v2276
        %v2434 = vmax.f32 %v2433, %v2284
        %v2435 = vmax.f32 %v2434, %v2292
        %v2436 = vmax.f32 %v2435, %v2300
        %v2437 = vmax.f32 %v2436, %v2308
        %v2438 = vmax.f32 %v2437, %v2316
        %v2439 = vrot.slane %v2438, 4
        %v2440 = vmax.f32 %v2438, %v2439
        %v2441 = vrot.slane %v2440, 2
        %v2442 = vmax.f32 %v2440, %v2441
        %v2443 = vrot.slane %v2442, 1
        %v2444 = vmax.f32 %v2442, %v2443
        %v2445 = vmax.f32 %v2197, %v2205
        %v2446 = vmax.f32 %v2445, %v2213
        %v2447 = vmax.f32 %v2446, %v2221
        %v2448 = vmax.f32 %v2447, %v2229
        %v2449 = vmax.f32 %v2448, %v2237
        %v2450 = vmax.f32 %v2449, %v2245
        %v2451 = vmax.f32 %v2450, %v2253
        %v2452 = vmax.f32 %v2451, %v2261
        %v2453 = vmax.f32 %v2452, %v2269
        %v2454 = vmax.f32 %v2453, %v2277
        %v2455 = vmax.f32 %v2454, %v2285
        %v2456 = vmax.f32 %v2455, %v2293
        %v2457 = vmax.f32 %v2456, %v2301
        %v2458 = vmax.f32 %v2457, %v2309
        %v2459 = vmax.f32 %v2458, %v2317
        %v2460 = vrot.slane %v2459, 4
        %v2461 = vmax.f32 %v2459, %v2460
        %v2462 = vrot.slane %v2461, 2
        %v2463 = vmax.f32 %v2461, %v2462
        %v2464 = vrot.slane %v2463, 1
        %v2465 = vmax.f32 %v2463, %v2464
        %v2466 = vmax.f32 %v2198, %v2206
        %v2467 = vmax.f32 %v2466, %v2214
        %v2468 = vmax.f32 %v2467, %v2222
        %v2469 = vmax.f32 %v2468, %v2230
        %v2470 = vmax.f32 %v2469, %v2238
        %v2471 = vmax.f32 %v2470, %v2246
        %v2472 = vmax.f32 %v2471, %v2254
        %v2473 = vmax.f32 %v2472, %v2262
        %v2474 = vmax.f32 %v2473, %v2270
        %v2475 = vmax.f32 %v2474, %v2278
        %v2476 = vmax.f32 %v2475, %v2286
        %v2477 = vmax.f32 %v2476, %v2294
        %v2478 = vmax.f32 %v2477, %v2302
        %v2479 = vmax.f32 %v2478, %v2310
        %v2480 = vmax.f32 %v2479, %v2318
        %v2481 = vrot.slane %v2480, 4
        %v2482 = vmax.f32 %v2480, %v2481
        %v2483 = vrot.slane %v2482, 2
        %v2484 = vmax.f32 %v2482, %v2483
        %v2485 = vrot.slane %v2484, 1
        %v2486 = vmax.f32 %v2484, %v2485
        %p2487 = scmp.eq.s32.totalorder %s30, 0
        // Predicated region
        $region65: #{tpu_custom_call.1} parent=59 // pred_check
          %p2488 = pneg %p2487
        $region66: #{tpu_custom_call.1} parent=59 // pred_check_branch
          %2490 = sbr.rel (%p2488) target = $region68
        $region67: #{tpu_custom_call.1} parent=59 // pred_region
          %v2499 = vcombine.low %v2339, %v2360
          %v2500 = vcombine.low %v2381, %v2402
          %v2501 = vcombine.low %v2423, %v2444
          %v2502 = vcombine.low %v2465, %v2486
          %v2504 = vunpack.c.l.s4 1966171168
          %v2505 = vunpack.c.0.s8 %v2504
          %v2506 = vlaneseq
          %v2507 = vshrl.u32 %v2506, 7
          %v2508 = vsub.s32 %v2505, %v2507
          %v2509 = vrot.slane %v2499, %v2508
          %v2511 = vunpack.c.l.s4 1966171168
          %v2512 = vunpack.c.0.s8 %v2511
          %v2513 = vlaneseq
          %v2514 = vshrl.u32 %v2513, 7
          %v2515 = vsub.s32 %v2512, %v2514
          %v2516 = vrot.slane %v2500, %v2515
          %v2518 = vunpack.c.l.s4 1966171168
          %v2519 = vunpack.c.0.s8 %v2518
          %v2520 = vlaneseq
          %v2521 = vshrl.u32 %v2520, 7
          %v2522 = vsub.s32 %v2519, %v2521
          %v2523 = vrot.slane %v2501, %v2522
          %v2525 = vunpack.c.l.s4 1966171168
          %v2526 = vunpack.c.0.s8 %v2525
          %v2527 = vlaneseq
          %v2528 = vshrl.u32 %v2527, 7
          %v2529 = vsub.s32 %v2526, %v2528
          %v2530 = vrot.slane %v2502, %v2529
          %v2531 = vcombine.low %v2509, %v2516
          %v2532 = vcombine.low %v2523, %v2530
          %v2534 = vunpack.c.l.s4 1966171168
          %v2535 = vunpack.c.0.s8 %v2534
          %v2536 = vlaneseq
          %v2537 = vshrl.u32 %v2536, 7
          %v2538 = vsub.s32 %v2535, %v2537
          %v2539 = vrot.slane %v2531, %v2538
          %v2541 = vunpack.c.l.s4 1966171168
          %v2542 = vunpack.c.0.s8 %v2541
          %v2543 = vlaneseq
          %v2544 = vshrl.u32 %v2543, 7
          %v2545 = vsub.s32 %v2542, %v2544
          %v2546 = vrot.slane %v2532, %v2545
          %v2547 = vcombine.low %v2539, %v2546
          %2549 = vst [vmem:[%s390] sm:$0xff] %v2547
        $region68: #{tpu_custom_call.1} parent=59 // pred_fallthru
          _
        %p2550 = scmp.gt.s32.totalorder %s30, 0
        // Predicated region
        $region69: #{tpu_custom_call.1} parent=59 // pred_check
          %p2551 = pneg %p2550
        $region70: #{tpu_custom_call.1} parent=59 // pred_check_branch
          %2553 = sbr.rel (%p2551) target = $region72
        $region71: #{tpu_custom_call.1} parent=59 // pred_region
          %v2554 = vld [vmem:[%s390] sm:$0xff]
          %v2563 = vcombine.low %v2339, %v2360
          %v2564 = vcombine.low %v2381, %v2402
          %v2565 = vcombine.low %v2423, %v2444
          %v2566 = vcombine.low %v2465, %v2486
          %v2568 = vunpack.c.l.s4 1966171168
          %v2569 = vunpack.c.0.s8 %v2568
          %v2570 = vlaneseq
          %v2571 = vshrl.u32 %v2570, 7
          %v2572 = vsub.s32 %v2569, %v2571
          %v2573 = vrot.slane %v2563, %v2572
          %v2575 = vunpack.c.l.s4 1966171168
          %v2576 = vunpack.c.0.s8 %v2575
          %v2577 = vlaneseq
          %v2578 = vshrl.u32 %v2577, 7
          %v2579 = vsub.s32 %v2576, %v2578
          %v2580 = vrot.slane %v2564, %v2579
          %v2582 = vunpack.c.l.s4 1966171168
          %v2583 = vunpack.c.0.s8 %v2582
          %v2584 = vlaneseq
          %v2585 = vshrl.u32 %v2584, 7
          %v2586 = vsub.s32 %v2583, %v2585
          %v2587 = vrot.slane %v2565, %v2586
          %v2589 = vunpack.c.l.s4 1966171168
          %v2590 = vunpack.c.0.s8 %v2589
          %v2591 = vlaneseq
          %v2592 = vshrl.u32 %v2591, 7
          %v2593 = vsub.s32 %v2590, %v2592
          %v2594 = vrot.slane %v2566, %v2593
          %v2595 = vcombine.low %v2573, %v2580
          %v2596 = vcombine.low %v2587, %v2594
          %v2598 = vunpack.c.l.s4 1966171168
          %v2599 = vunpack.c.0.s8 %v2598
          %v2600 = vlaneseq
          %v2601 = vshrl.u32 %v2600, 7
          %v2602 = vsub.s32 %v2599, %v2601
          %v2603 = vrot.slane %v2595, %v2602
          %v2605 = vunpack.c.l.s4 1966171168
          %v2606 = vunpack.c.0.s8 %v2605
          %v2607 = vlaneseq
          %v2608 = vshrl.u32 %v2607, 7
          %v2609 = vsub.s32 %v2606, %v2608
          %v2610 = vrot.slane %v2596, %v2609
          %v2611 = vcombine.low %v2603, %v2610
          %v2613 = vmax.f32 %v2554, %v2611
          %2614 = vst [vmem:[%s390] sm:$0xff] %v2613
        $region72: #{tpu_custom_call.1} parent=59 // pred_fallthru
          _
        %s2615 = sand.u32 %s262, 1
        %s2616 = scalar_lea.sflag [#allocation4], %s2615
        %s2617 = sand.u32 %s262, 1
        %s2618 = smul.addr %s2617, 8
        %s2619 = scalar_lea.vmem [#allocation5], %s2618
        // Predicated region
        $region73: #{tpu_custom_call.1} parent=59 // pred_check
          %p2620 = pneg %p272
        $region74: #{tpu_custom_call.1} parent=59 // pred_check_branch
          %2622 = sbr.rel (%p2620) target = $region76
        $region75: #{tpu_custom_call.1} parent=59 // pred_region
          %s2624 = ssub.s32 128, 128
          %2625 = vsyncadd %s2616, %s2624
          %s2626 = smul.addr %s29, 8
          %s2627 = smul.addr %s2626, 16
          %s2628 = scalar_lea.hbm %s10, %s2627
          %s2630 = sshll.u32 %s2619, 4
          %s2631 = int_to_ptr.vmem [resolvable:$true] %s2630
          %2633 = dma.vmem_to_hbm [thread:$0]  %s2631, 128, %s2628, %s2616
        $region76: #{tpu_custom_call.1} parent=59 // pred_fallthru
          _
      $region60: #{tpu_custom_call.1} parent=5 // pred_fallthru
        _
      %p2634 = scmp.le.s32.totalorder 2, %s20
      // Predicated region
      $region77: #{tpu_custom_call.1} parent=5 // pred_check
        %p2635 = pneg %p2634
      $region78: #{tpu_custom_call.1} parent=5 // pred_check_branch
        %2637 = sbr.rel (%p2635) target = $region80
      $region79: #{tpu_custom_call.1} parent=5 // pred_region
        %s2638 = ssub.s32 %s20, 2
        // Predicated region
        $region81: #{tpu_custom_call.1} parent=79 // pred_check
          %p2639 = pneg %p278
        $region82: #{tpu_custom_call.1} parent=79 // pred_check_branch
          %2641 = sbr.rel (%p2639) target = $region84
        $region83: #{tpu_custom_call.1} parent=79 // pred_region
          %s2642 = sand.u32 %s263, 1
          %s2643 = scalar_lea.sflag [#allocation4], %s2642
          %s2644 = sand.u32 %s263, 1
          %s2645 = smul.addr %s2644, 8
          %s2646 = scalar_lea.vmem [#allocation5], %s2645
          %2647 = dma.done %s2643, 128
        $region84: #{tpu_custom_call.1} parent=79 // pred_fallthru
          _
      $region80: #{tpu_custom_call.1} parent=5 // pred_fallthru
        _
    $region6: #{tpu_custom_call.1} parent=1 // loop_footer
      %s24 = sadd.s32 1, %s20
    $region7: #{tpu_custom_call.1} parent=1 // loop_footer_branch
      %19 = sbr.rel target = $region3
    $region8: #{tpu_custom_call.1} parent=1 // loop_exit
      _
    %2648 = vsyncpa [#allocation3], 1
    %s2649 = scalar_lea.sflag [#allocation3], 1
    %2650 = vsyncpa %s2649, 1
    %2651 = vsyncpa [#allocation4], 1
    %s2652 = scalar_lea.sflag [#allocation4], 1
    %2653 = vsyncpa %s2652, 1

</llo_original>
